<compile_context>
chip_gen: v5e
topology: v5e:2x2
jax: 0.10.0
libtpu: 0.0.40
codegen_flags: <defaults>
</compile_context>

<pallas_src>
import math
import functools

import jax
import jax.numpy as jnp
from jax import lax
from jax.experimental import pallas as pl
from jax.experimental.pallas import tpu as pltpu


# ----------------------- Fused stacked-encoder kernel ----------------------

def _stacked_encoder_kernel(
        # activations (resident across the layer grid axis)
        q_ref, k_ref, v_ref,
        # per-layer weights (block = one layer, pipelined along the layer axis)
        wq_ref, wk_ref, wv_ref, wo_ref,
        bq_ref, bk_ref, bv_ref, bo_ref,
        ln1g_ref, ln1b_ref,
        w1_ref, b1_ref, w2_ref, b2_ref,
        ln2g_ref, ln2b_ref,
        # output (written only at the last layer)
        max_out_ref,
        # VMEM-resident running activation
        x_scratch,
        *, nhead, eps):
    f32, bf16 = jnp.float32, jnp.bfloat16
    Bt, S, D = q_ref.shape
    BS = Bt * S
    dh = D // nhead

    layer = pl.program_id(1)
    first = layer == 0
    last = layer == pl.num_programs(1) - 1

    # Hygiene: never read uninitialized VMEM (the select below discards it,
    # but zeroing documents intent and is two vreg stores).
    @pl.when(first)
    def _init():
        x_scratch[...] = jnp.zeros_like(x_scratch)

    x = x_scratch[...]                              # [BS, D] f32 (running act)
    q_in = q_ref[...].reshape(BS, D)
    k_in = k_ref[...].reshape(BS, D)
    v_in = v_ref[...].reshape(BS, D)

    # Layer 0 cross-attends on (q, k, v); later layers self-attend on x.
    # (scalar -> i32 vector broadcast + compare: robust vector select mask)
    first_mask = jnp.full((BS, D), layer, dtype=jnp.int32) == 0
    q_src = jnp.where(first_mask, q_in, x)
    k_src = jnp.where(first_mask, k_in, x)
    v_src = jnp.where(first_mask, v_in, x)

    # ---- Q/K/V projections on the flattened [Bt*S, D] slab -----------------
    # (1/sqrt(dh) is already folded into wq / bq at init.)
    Qp = jnp.dot(q_src.astype(bf16), wq_ref[0], preferred_element_type=f32) + bq_ref[0]
    Kp = jnp.dot(k_src.astype(bf16), wk_ref[0], preferred_element_type=f32) + bk_ref[0]
    Vp = jnp.dot(v_src.astype(bf16), wv_ref[0], preferred_element_type=f32) + bv_ref[0]

    # ---- per-head attention; out-projection accumulated per head -----------
    wo = wo_ref[0]                                   # [D, D] bf16 (load once)
    attn_proj = None
    for h in range(nhead):
        lo = h * dh
        qh = Qp[:, lo:lo + dh].reshape(Bt, S, dh)
        kh = Kp[:, lo:lo + dh].reshape(Bt, S, dh)
        vh = Vp[:, lo:lo + dh].reshape(Bt, S, dh)
        s = jnp.einsum('bqd,bkd->bqk', qh.astype(bf16), kh.astype(bf16),
                       preferred_element_type=f32)               # [Bt, S, S]
        m = jnp.max(s, axis=-1, keepdims=True)
        p = jnp.exp(s - m)
        denom = jnp.sum(p, axis=-1, keepdims=True)
        p = p * pl.reciprocal(denom, approx=True)
        ho = jnp.einsum('bqk,bkd->bqd', p.astype(bf16), vh.astype(bf16),
                        preferred_element_type=f32)              # [Bt, S, dh]
        contrib = jnp.dot(ho.reshape(BS, dh).astype(bf16), wo[lo:lo + dh, :],
                          preferred_element_type=f32)            # [BS, D]
        attn_proj = contrib if attn_proj is None else attn_proj + contrib
    attn_proj = attn_proj + bo_ref[0]

    # ---- residual + LayerNorm 1 --------------------------------------------
    x1 = q_src + attn_proj
    mu = jnp.mean(x1, axis=-1, keepdims=True)
    c = x1 - mu
    var = jnp.mean(c * c, axis=-1, keepdims=True)
    x1 = c * lax.rsqrt(var + eps) * ln1g_ref[0] + ln1b_ref[0]

    # ---- FFN (w1 + ReLU + w2) + residual + LayerNorm 2 ----------------------
    h1 = jnp.dot(x1.astype(bf16), w1_ref[0], preferred_element_type=f32) + b1_ref[0]
    h1 = jnp.maximum(h1, 0.0)
    ff = jnp.dot(h1.astype(bf16), w2_ref[0], preferred_element_type=f32) + b2_ref[0]
    y = x1 + ff
    mu2 = jnp.mean(y, axis=-1, keepdims=True)
    c2 = y - mu2
    var2 = jnp.mean(c2 * c2, axis=-1, keepdims=True)
    y = c2 * lax.rsqrt(var2 + eps) * ln2g_ref[0] + ln2b_ref[0]

    # Running activation stays in VMEM for the next layer iteration.
    x_scratch[...] = y

    # ---- epilogue: only the final layer's seq-max is ever stored -----------
    @pl.when(last)
    def _store():
        max_out_ref[...] = jnp.max(y.reshape(Bt, S, D), axis=1, keepdims=True)


# ----------------------------- Host wrapper --------------------------------

def _choose_bt(B, S, target_rows=256):
    """Batch elements per grid step: fill the MXU M-dim (~target_rows rows)
    while keeping >= 2 programs on the parallel batch axis when possible
    (v7x has 2 TensorCores sharing the grid)."""
    cap = max(1, target_rows // max(S, 1))
    bt = 1
    for c in range(1, B + 1):
        if B % c == 0 and c <= cap:
            bt = c
    if B >= 2:
        while bt > 1 and B // bt < 2:
            nxt = bt - 1
            while nxt > 1 and B % nxt != 0:
                nxt -= 1
            bt = nxt
    return bt


def transformer_model_forward(q, k, v, params, nhead, *, eps=1e-5, bt=None):
    """Full TransformerModel.forward: L fused encoder layers + max over seq."""
    B, S, D = q.shape
    L = params["wq"].shape[0]
    assert D % nhead == 0
    if bt is None:
        bt = _choose_bt(B, S)
    assert B % bt == 0

    act_spec = pl.BlockSpec((bt, S, D), lambda b, l: (b, 0, 0))   # resident over l

    def wspec(a):   # one layer's slice, pipelined along the layer axis
        return pl.BlockSpec((1,) + a.shape[1:], lambda b, l: (l, 0, 0))

    weight_names = ("wq", "wk", "wv", "wo", "bq", "bk", "bv", "bo",
                    "ln1_g", "ln1_b", "w1", "b1", "w2", "b2", "ln2_g", "ln2_b")
    weights = [params[n] for n in weight_names]

    kernel = functools.partial(_stacked_encoder_kernel, nhead=nhead, eps=eps)

    out = pl.pallas_call(
        kernel,
        out_shape=jax.ShapeDtypeStruct((B, 1, D), jnp.float32),
        grid=(B // bt, L),                      # batch (parallel) x layers (arbitrary)
        in_specs=[act_spec, act_spec, act_spec] + [wspec(w) for w in weights],
        out_specs=pl.BlockSpec((bt, 1, D), lambda b, l: (b, 0, 0)),
        scratch_shapes=[pltpu.VMEM((bt * S, D), jnp.float32)],    # running activation
        compiler_params=pltpu.CompilerParams(
            dimension_semantics=("parallel", "arbitrary"),
            vmem_limit_bytes=32 * 1024 * 1024),   # raise on v6e at realistic sizes
    )(q, k, v, *weights)
    return out


# ----------------------------- Params / reference ---------------------------

def init_params(key, d_model, nhead, num_layers, dim_feedforward):
    """Stacked per-layer params, laid out for the fused kernel.
    Matmul weights bf16 (f32 accumulation in-kernel); biases / LN affine f32.
    The attention scale 1/sqrt(dh) is folded into wq and bq."""
    f32, bf16 = jnp.float32, jnp.bfloat16
    dh = d_model // nhead
    qscale = 1.0 / math.sqrt(dh)
    std = 0.05
    ks = jax.random.split(key, 12)
    dd = (num_layers, d_model, d_model)
    wq = std * jax.random.normal(ks[0], dd, f32) * qscale
    wk = std * jax.random.normal(ks[1], dd, f32)
    wv = std * jax.random.normal(ks[2], dd, f32)
    wo = std * jax.random.normal(ks[3], dd, f32)
    w1 = std * jax.random.normal(ks[4], (num_layers, d_model, dim_feedforward), f32)
    w2 = std * jax.random.normal(ks[5], (num_layers, dim_feedforward, d_model), f32)
    bq = 0.01 * jax.random.normal(ks[6], (num_layers, 1, d_model), f32) * qscale
    bk = 0.01 * jax.random.normal(ks[7], (num_layers, 1, d_model), f32)
    bv = 0.01 * jax.random.normal(ks[8], (num_layers, 1, d_model), f32)
    bo = 0.01 * jax.random.normal(ks[9], (num_layers, 1, d_model), f32)
    b1 = 0.01 * jax.random.normal(ks[10], (num_layers, 1, dim_feedforward), f32)
    b2 = 0.01 * jax.random.normal(ks[11], (num_layers, 1, d_model), f32)
    return {
        "wq": wq.astype(bf16), "wk": wk.astype(bf16), "wv": wv.astype(bf16),
        "wo": wo.astype(bf16),
        "bq": bq, "bk": bk, "bv": bv, "bo": bo,
        "ln1_g": jnp.ones((num_layers, 1, d_model), f32),
        "ln1_b": jnp.zeros((num_layers, 1, d_model), f32),
        "w1": w1.astype(bf16), "b1": b1,
        "w2": w2.astype(bf16), "b2": b2,
        "ln2_g": jnp.ones((num_layers, 1, d_model), f32),
        "ln2_b": jnp.zeros((num_layers, 1, d_model), f32),
    }


def _layer_norm(x, g, b, eps):
    mu = jnp.mean(x, axis=-1, keepdims=True)
    c = x - mu
    var = jnp.mean(c * c, axis=-1, keepdims=True)
    return c * lax.rsqrt(var + eps) * g + b


def ref_forward(q, k, v, params, nhead, eps=1e-5):
    """Pure-JAX reference with matching numerics (bf16 matmuls, f32 elsewhere)."""
    f32, bf16 = jnp.float32, jnp.bfloat16
    B, S, D = q.shape
    L = params["wq"].shape[0]
    dh = D // nhead

    def mm(a, w):
        return jnp.einsum('bsd,df->bsf', a.astype(bf16), w,
                          preferred_element_type=f32)

    x = None
    for i in range(L):
        if i == 0:
            qs, ks_, vs = q, k, v
        else:
            qs = ks_ = vs = x
        Qp = mm(qs, params["wq"][i]) + params["bq"][i]
        Kp = mm(ks_, params["wk"][i]) + params["bk"][i]
        Vp = mm(vs, params["wv"][i]) + params["bv"][i]
        Qh = Qp.reshape(B, S, nhead, dh).transpose(0, 2, 1, 3)
        Kh = Kp.reshape(B, S, nhead, dh).transpose(0, 2, 1, 3)
        Vh = Vp.reshape(B, S, nhead, dh).transpose(0, 2, 1, 3)
        s = jnp.einsum('bhqd,bhkd->bhqk', Qh.astype(bf16), Kh.astype(bf16),
                       preferred_element_type=f32)
        p = jax.nn.softmax(s, axis=-1)
        ho = jnp.einsum('bhqk,bhkd->bhqd', p.astype(bf16), Vh.astype(bf16),
                        preferred_element_type=f32)
        attn = ho.transpose(0, 2, 1, 3).reshape(B, S, D)
        proj = mm(attn, params["wo"][i]) + params["bo"][i]
        x1 = _layer_norm(qs + proj, params["ln1_g"][i], params["ln1_b"][i], eps)
        h1 = jnp.maximum(mm(x1, params["w1"][i]) + params["b1"][i], 0.0)
        ff = mm(h1, params["w2"][i]) + params["b2"][i]
        x = _layer_norm(x1 + ff, params["ln2_g"][i], params["ln2_b"][i], eps)
    return jnp.max(x, axis=1, keepdims=True)


# --------------------------------- Demo -------------------------------------

if __name__ == "__main__":
    B, S, D = 4, 8, 32
    NHEAD, NUM_LAYERS, DFF = 2, 2, 64

    k0, k1, k2 = jax.random.split(jax.random.PRNGKey(0), 3)
    q = jax.random.normal(k0, (B, S, D), jnp.float32)
    k = jax.random.normal(k1, (B, S, D), jnp.float32)
    v = jax.random.normal(k2, (B, S, D), jnp.float32)

    params = init_params(jax.random.PRNGKey(42), D, NHEAD, NUM_LAYERS, DFF)

    out = transformer_model_forward(q, k, v, params, NHEAD)
    out = jax.block_until_ready(out)
    assert out.shape == (B, 1, D), out.shape
    assert bool(jnp.all(jnp.isfinite(out)))

    ref = ref_forward(q, k, v, params, NHEAD)
    err = float(jnp.max(jnp.abs(out - ref)))
    assert err < 5e-2, f"max abs err vs reference: {err}"
    print("KERNEL_OK")
</pallas_src>

<mosaic_0001>
module attributes {stable_mosaic.version = 11 : i64} {
  func.func @_stacked_encoder_kernel(%arg0: i32, %arg1: i32, %arg2: memref<2x8x32xf32, #tpu.memory_space<vmem>>, %arg3: memref<2x8x32xf32, #tpu.memory_space<vmem>>, %arg4: memref<2x8x32xf32, #tpu.memory_space<vmem>>, %arg5: memref<1x32x32xbf16, #tpu.memory_space<vmem>>, %arg6: memref<1x32x32xbf16, #tpu.memory_space<vmem>>, %arg7: memref<1x32x32xbf16, #tpu.memory_space<vmem>>, %arg8: memref<1x32x32xbf16, #tpu.memory_space<vmem>>, %arg9: memref<1x1x32xf32, #tpu.memory_space<vmem>>, %arg10: memref<1x1x32xf32, #tpu.memory_space<vmem>>, %arg11: memref<1x1x32xf32, #tpu.memory_space<vmem>>, %arg12: memref<1x1x32xf32, #tpu.memory_space<vmem>>, %arg13: memref<1x1x32xf32, #tpu.memory_space<vmem>>, %arg14: memref<1x1x32xf32, #tpu.memory_space<vmem>>, %arg15: memref<1x32x64xbf16, #tpu.memory_space<vmem>>, %arg16: memref<1x1x64xf32, #tpu.memory_space<vmem>>, %arg17: memref<1x64x32xbf16, #tpu.memory_space<vmem>>, %arg18: memref<1x1x32xf32, #tpu.memory_space<vmem>>, %arg19: memref<1x1x32xf32, #tpu.memory_space<vmem>>, %arg20: memref<1x1x32xf32, #tpu.memory_space<vmem>>, %arg21: memref<2x1x32xf32, #tpu.memory_space<vmem>>, %arg22: memref<16x32xf32, #tpu.memory_space<vmem>>) attributes {dimension_semantics = [#tpu.dimension_semantics<parallel>, #tpu.dimension_semantics<arbitrary>], iteration_bounds = array<i64: 2, 2>, scalar_prefetch = 0 : i64, scratch_operands = 1 : i64, tpu.core_type = #tpu.core_type<tc>, window_params = [{transform_indices = @transform_0, window_bounds = array<i64: 2, 8, 32>}, {transform_indices = @transform_1, window_bounds = array<i64: 2, 8, 32>}, {transform_indices = @transform_2, window_bounds = array<i64: 2, 8, 32>}, {transform_indices = @transform_3, window_bounds = array<i64: 1, 32, 32>}, {transform_indices = @transform_4, window_bounds = array<i64: 1, 32, 32>}, {transform_indices = @transform_5, window_bounds = array<i64: 1, 32, 32>}, {transform_indices = @transform_6, window_bounds = array<i64: 1, 32, 32>}, {transform_indices = @transform_7, window_bounds = array<i64: 1, 1, 32>}, {transform_indices = @transform_8, window_bounds = array<i64: 1, 1, 32>}, {transform_indices = @transform_9, window_bounds = array<i64: 1, 1, 32>}, {transform_indices = @transform_10, window_bounds = array<i64: 1, 1, 32>}, {transform_indices = @transform_11, window_bounds = array<i64: 1, 1, 32>}, {transform_indices = @transform_12, window_bounds = array<i64: 1, 1, 32>}, {transform_indices = @transform_13, window_bounds = array<i64: 1, 32, 64>}, {transform_indices = @transform_14, window_bounds = array<i64: 1, 1, 64>}, {transform_indices = @transform_15, window_bounds = array<i64: 1, 64, 32>}, {transform_indices = @transform_16, window_bounds = array<i64: 1, 1, 32>}, {transform_indices = @transform_17, window_bounds = array<i64: 1, 1, 32>}, {transform_indices = @transform_18, window_bounds = array<i64: 1, 1, 32>}, {transform_indices = @transform_19, window_bounds = array<i64: 2, 1, 32>}]} {
    %c0_i32 = arith.constant 0 : i32
    %0 = arith.cmpi eq, %arg1, %c0_i32 : i32
    %c1_i32 = arith.constant 1 : i32
    %1 = arith.cmpi eq, %arg1, %c1_i32 : i32
    %2 = arith.extui %0 : i1 to i32
    %c0_i32_0 = arith.constant 0 : i32
    %3 = arith.cmpi ne, %2, %c0_i32_0 : i32
    scf.if %3 {
      %cst_88 = arith.constant 0.000000e+00 : f32
      %171 = vector.broadcast %cst_88 : f32 to vector<16x32xf32>
      %c0_89 = arith.constant 0 : index
      %c0_90 = arith.constant 0 : index
      %172 = vector.load %arg22[%c0_89, %c0_90] : memref<16x32xf32, #tpu.memory_space<vmem>>, vector<16x32xf32>
      tpu.vector_store %arg22[%c0_89, %c0_90], %171 {strides = array<i32>} : memref<16x32xf32, #tpu.memory_space<vmem>>, vector<16x32xf32>,
    } else {
    }
    %c0 = arith.constant 0 : index
    %c0_1 = arith.constant 0 : index
    %4 = vector.load %arg22[%c0, %c0_1] : memref<16x32xf32, #tpu.memory_space<vmem>>, vector<16x32xf32>
    %c0_2 = arith.constant 0 : index
    %c0_3 = arith.constant 0 : index
    %c0_4 = arith.constant 0 : index
    %5 = vector.load %arg2[%c0_2, %c0_3, %c0_4] : memref<2x8x32xf32, #tpu.memory_space<vmem>>, vector<2x8x32xf32>
    %6 = vector.shape_cast %5 : vector<2x8x32xf32> to vector<16x32xf32>
    %c0_5 = arith.constant 0 : index
    %c0_6 = arith.constant 0 : index
    %c0_7 = arith.constant 0 : index
    %7 = vector.load %arg3[%c0_5, %c0_6, %c0_7] : memref<2x8x32xf32, #tpu.memory_space<vmem>>, vector<2x8x32xf32>
    %8 = vector.shape_cast %7 : vector<2x8x32xf32> to vector<16x32xf32>
    %c0_8 = arith.constant 0 : index
    %c0_9 = arith.constant 0 : index
    %c0_10 = arith.constant 0 : index
    %9 = vector.load %arg4[%c0_8, %c0_9, %c0_10] : memref<2x8x32xf32, #tpu.memory_space<vmem>>, vector<2x8x32xf32>
    %10 = vector.shape_cast %9 : vector<2x8x32xf32> to vector<16x32xf32>
    %11 = vector.broadcast %arg1 : i32 to vector<16x32xi32>
    %c0_i32_11 = arith.constant 0 : i32
    %12 = vector.broadcast %c0_i32_11 : i32 to vector<16x32xi32>
    %13 = arith.cmpi eq, %11, %12 : vector<16x32xi32>
    %14 = arith.select %13, %6, %4 : vector<16x32xi1>, vector<16x32xf32>
    %15 = arith.select %13, %8, %4 : vector<16x32xi1>, vector<16x32xf32>
    %16 = arith.select %13, %10, %4 : vector<16x32xi1>, vector<16x32xf32>
    %17 = arith.truncf %14 : vector<16x32xf32> to vector<16x32xbf16>
    %c0_12 = arith.constant 0 : index
    %c0_13 = arith.constant 0 : index
    %c0_14 = arith.constant 0 : index
    %18 = vector.load %arg5[%c0_12, %c0_13, %c0_14] : memref<1x32x32xbf16, #tpu.memory_space<vmem>>, vector<1x32x32xbf16>
    %19 = vector.shape_cast %18 : vector<1x32x32xbf16> to vector<32x32xbf16>
    %cst = arith.constant dense<0.000000e+00> : vector<16x32xf32>
    %20 = tpu.matmul %17, %19, %cst {dimension_numbers = #tpu.dot_dimension_numbers<[1], [0], [0], [1], [0, 0, 1, 1], [], []>} : vector<16x32xbf16>, vector<32x32xbf16>, vector<16x32xf32> -> vector<16x32xf32>
    %c0_15 = arith.constant 0 : index
    %c0_16 = arith.constant 0 : index
    %c0_17 = arith.constant 0 : index
    %21 = vector.load %arg9[%c0_15, %c0_16, %c0_17] : memref<1x1x32xf32, #tpu.memory_space<vmem>>, vector<1x1x32xf32>
    %22 = vector.shape_cast %21 : vector<1x1x32xf32> to vector<1x32xf32>
    %23 = vector.broadcast %22 : vector<1x32xf32> to vector<16x32xf32>
    %24 = arith.addf %20, %23 : vector<16x32xf32>
    %25 = arith.truncf %15 : vector<16x32xf32> to vector<16x32xbf16>
    %c0_18 = arith.constant 0 : index
    %c0_19 = arith.constant 0 : index
    %c0_20 = arith.constant 0 : index
    %26 = vector.load %arg6[%c0_18, %c0_19, %c0_20] : memref<1x32x32xbf16, #tpu.memory_space<vmem>>, vector<1x32x32xbf16>
    %27 = vector.shape_cast %26 : vector<1x32x32xbf16> to vector<32x32xbf16>
    %cst_21 = arith.constant dense<0.000000e+00> : vector<16x32xf32>
    %28 = tpu.matmul %25, %27, %cst_21 {dimension_numbers = #tpu.dot_dimension_numbers<[1], [0], [0], [1], [0, 0, 1, 1], [], []>} : vector<16x32xbf16>, vector<32x32xbf16>, vector<16x32xf32> -> vector<16x32xf32>
    %c0_22 = arith.constant 0 : index
    %c0_23 = arith.constant 0 : index
    %c0_24 = arith.constant 0 : index
    %29 = vector.load %arg10[%c0_22, %c0_23, %c0_24] : memref<1x1x32xf32, #tpu.memory_space<vmem>>, vector<1x1x32xf32>
    %30 = vector.shape_cast %29 : vector<1x1x32xf32> to vector<1x32xf32>
    %31 = vector.broadcast %30 : vector<1x32xf32> to vector<16x32xf32>
    %32 = arith.addf %28, %31 : vector<16x32xf32>
    %33 = arith.truncf %16 : vector<16x32xf32> to vector<16x32xbf16>
    %c0_25 = arith.constant 0 : index
    %c0_26 = arith.constant 0 : index
    %c0_27 = arith.constant 0 : index
    %34 = vector.load %arg7[%c0_25, %c0_26, %c0_27] : memref<1x32x32xbf16, #tpu.memory_space<vmem>>, vector<1x32x32xbf16>
    %35 = vector.shape_cast %34 : vector<1x32x32xbf16> to vector<32x32xbf16>
    %cst_28 = arith.constant dense<0.000000e+00> : vector<16x32xf32>
    %36 = tpu.matmul %33, %35, %cst_28 {dimension_numbers = #tpu.dot_dimension_numbers<[1], [0], [0], [1], [0, 0, 1, 1], [], []>} : vector<16x32xbf16>, vector<32x32xbf16>, vector<16x32xf32> -> vector<16x32xf32>
    %c0_29 = arith.constant 0 : index
    %c0_30 = arith.constant 0 : index
    %c0_31 = arith.constant 0 : index
    %37 = vector.load %arg11[%c0_29, %c0_30, %c0_31] : memref<1x1x32xf32, #tpu.memory_space<vmem>>, vector<1x1x32xf32>
    %38 = vector.shape_cast %37 : vector<1x1x32xf32> to vector<1x32xf32>
    %39 = vector.broadcast %38 : vector<1x32xf32> to vector<16x32xf32>
    %40 = arith.addf %36, %39 : vector<16x32xf32>
    %c0_32 = arith.constant 0 : index
    %c0_33 = arith.constant 0 : index
    %c0_34 = arith.constant 0 : index
    %41 = vector.load %arg8[%c0_32, %c0_33, %c0_34] : memref<1x32x32xbf16, #tpu.memory_space<vmem>>, vector<1x32x32xbf16>
    %42 = vector.shape_cast %41 : vector<1x32x32xbf16> to vector<32x32xbf16>
    %43 = vector.extract_strided_slice %24 {offsets = [0, 0], sizes = [16, 16], strides = [1, 1]} : vector<16x32xf32> to vector<16x16xf32>
    %44 = vector.shape_cast %43 : vector<16x16xf32> to vector<2x8x16xf32>
    %45 = vector.extract_strided_slice %32 {offsets = [0, 0], sizes = [16, 16], strides = [1, 1]} : vector<16x32xf32> to vector<16x16xf32>
    %46 = vector.shape_cast %45 : vector<16x16xf32> to vector<2x8x16xf32>
    %47 = vector.extract_strided_slice %40 {offsets = [0, 0], sizes = [16, 16], strides = [1, 1]} : vector<16x32xf32> to vector<16x16xf32>
    %48 = vector.shape_cast %47 : vector<16x16xf32> to vector<2x8x16xf32>
    %49 = arith.truncf %44 : vector<2x8x16xf32> to vector<2x8x16xbf16>
    %50 = arith.truncf %46 : vector<2x8x16xf32> to vector<2x8x16xbf16>
    "tpu.trace_start"() <{level = 10 : i32, message = "bqd,bkd->bqk"}> : () -> ()
    %cst_35 = arith.constant dense<0.000000e+00> : vector<2x8x8xf32>
    %51 = tpu.matmul %49, %50, %cst_35 {dimension_numbers = #tpu.dot_dimension_numbers<[2], [2], [1], [1], [0, 0, 0, 1, 1, 1], [0], [0]>} : vector<2x8x16xbf16>, vector<2x8x16xbf16>, vector<2x8x8xf32> -> vector<2x8x8xf32>
    "tpu.trace_stop"() : () -> ()
    %cst_36 = arith.constant dense<0xFF800000> : vector<2x8xf32>
    %52 = vector.multi_reduction <maximumf>, %51, %cst_36 [2] : vector<2x8x8xf32> to vector<2x8xf32>
    %53 = vector.shape_cast %52 : vector<2x8xf32> to vector<2x8x1xf32>
    %54 = vector.broadcast %53 : vector<2x8x1xf32> to vector<2x8x8xf32>
    %55 = arith.subf %51, %54 : vector<2x8x8xf32>
    %56 = math.exp %55 : vector<2x8x8xf32>
    %cst_37 = arith.constant dense<0.000000e+00> : vector<2x8xf32>
    %57 = vector.multi_reduction <add>, %56, %cst_37 [2] : vector<2x8x8xf32> to vector<2x8xf32>
    %58 = vector.shape_cast %57 : vector<2x8xf32> to vector<2x8x1xf32>
    %59 = tpu.reciprocal %58 {approx = true} : vector<2x8x1xf32> -> vector<2x8x1xf32>
    %60 = vector.broadcast %59 : vector<2x8x1xf32> to vector<2x8x8xf32>
    %61 = arith.mulf %56, %60 : vector<2x8x8xf32>
    %62 = arith.truncf %61 : vector<2x8x8xf32> to vector<2x8x8xbf16>
    %63 = arith.truncf %48 : vector<2x8x16xf32> to vector<2x8x16xbf16>
    "tpu.trace_start"() <{level = 10 : i32, message = "bqk,bkd->bqd"}> : () -> ()
    %cst_38 = arith.constant dense<0.000000e+00> : vector<2x8x16xf32>
    %64 = tpu.matmul %62, %63, %cst_38 {dimension_numbers = #tpu.dot_dimension_numbers<[2], [1], [1], [2], [0, 0, 0, 1, 1, 2], [0], [0]>} : vector<2x8x8xbf16>, vector<2x8x16xbf16>, vector<2x8x16xf32> -> vector<2x8x16xf32>
    "tpu.trace_stop"() : () -> ()
    %65 = vector.shape_cast %64 : vector<2x8x16xf32> to vector<16x16xf32>
    %66 = arith.truncf %65 : vector<16x16xf32> to vector<16x16xbf16>
    %67 = vector.extract_strided_slice %42 {offsets = [0, 0], sizes = [16, 32], strides = [1, 1]} : vector<32x32xbf16> to vector<16x32xbf16>
    %cst_39 = arith.constant dense<0.000000e+00> : vector<16x32xf32>
    %68 = tpu.matmul %66, %67, %cst_39 {dimension_numbers = #tpu.dot_dimension_numbers<[1], [0], [0], [1], [0, 0, 1, 1], [], []>} : vector<16x16xbf16>, vector<16x32xbf16>, vector<16x32xf32> -> vector<16x32xf32>
    %69 = vector.extract_strided_slice %24 {offsets = [0, 16], sizes = [16, 16], strides = [1, 1]} : vector<16x32xf32> to vector<16x16xf32>
    %70 = vector.shape_cast %69 : vector<16x16xf32> to vector<2x8x16xf32>
    %71 = vector.extract_strided_slice %32 {offsets = [0, 16], sizes = [16, 16], strides = [1, 1]} : vector<16x32xf32> to vector<16x16xf32>
    %72 = vector.shape_cast %71 : vector<16x16xf32> to vector<2x8x16xf32>
    %73 = vector.extract_strided_slice %40 {offsets = [0, 16], sizes = [16, 16], strides = [1, 1]} : vector<16x32xf32> to vector<16x16xf32>
    %74 = vector.shape_cast %73 : vector<16x16xf32> to vector<2x8x16xf32>
    %75 = arith.truncf %70 : vector<2x8x16xf32> to vector<2x8x16xbf16>
    %76 = arith.truncf %72 : vector<2x8x16xf32> to vector<2x8x16xbf16>
    "tpu.trace_start"() <{level = 10 : i32, message = "bqd,bkd->bqk"}> : () -> ()
    %cst_40 = arith.constant dense<0.000000e+00> : vector<2x8x8xf32>
    %77 = tpu.matmul %75, %76, %cst_40 {dimension_numbers = #tpu.dot_dimension_numbers<[2], [2], [1], [1], [0, 0, 0, 1, 1, 1], [0], [0]>} : vector<2x8x16xbf16>, vector<2x8x16xbf16>, vector<2x8x8xf32> -> vector<2x8x8xf32>
    "tpu.trace_stop"() : () -> ()
    %cst_41 = arith.constant dense<0xFF800000> : vector<2x8xf32>
    %78 = vector.multi_reduction <maximumf>, %77, %cst_41 [2] : vector<2x8x8xf32> to vector<2x8xf32>
    %79 = vector.shape_cast %78 : vector<2x8xf32> to vector<2x8x1xf32>
    %80 = vector.broadcast %79 : vector<2x8x1xf32> to vector<2x8x8xf32>
    %81 = arith.subf %77, %80 : vector<2x8x8xf32>
    %82 = math.exp %81 : vector<2x8x8xf32>
    %cst_42 = arith.constant dense<0.000000e+00> : vector<2x8xf32>
    %83 = vector.multi_reduction <add>, %82, %cst_42 [2] : vector<2x8x8xf32> to vector<2x8xf32>
    %84 = vector.shape_cast %83 : vector<2x8xf32> to vector<2x8x1xf32>
    %85 = tpu.reciprocal %84 {approx = true} : vector<2x8x1xf32> -> vector<2x8x1xf32>
    %86 = vector.broadcast %85 : vector<2x8x1xf32> to vector<2x8x8xf32>
    %87 = arith.mulf %82, %86 : vector<2x8x8xf32>
    %88 = arith.truncf %87 : vector<2x8x8xf32> to vector<2x8x8xbf16>
    %89 = arith.truncf %74 : vector<2x8x16xf32> to vector<2x8x16xbf16>
    "tpu.trace_start"() <{level = 10 : i32, message = "bqk,bkd->bqd"}> : () -> ()
    %cst_43 = arith.constant dense<0.000000e+00> : vector<2x8x16xf32>
    %90 = tpu.matmul %88, %89, %cst_43 {dimension_numbers = #tpu.dot_dimension_numbers<[2], [1], [1], [2], [0, 0, 0, 1, 1, 2], [0], [0]>} : vector<2x8x8xbf16>, vector<2x8x16xbf16>, vector<2x8x16xf32> -> vector<2x8x16xf32>
    "tpu.trace_stop"() : () -> ()
    %91 = vector.shape_cast %90 : vector<2x8x16xf32> to vector<16x16xf32>
    %92 = arith.truncf %91 : vector<16x16xf32> to vector<16x16xbf16>
    %93 = vector.extract_strided_slice %42 {offsets = [16, 0], sizes = [16, 32], strides = [1, 1]} : vector<32x32xbf16> to vector<16x32xbf16>
    %cst_44 = arith.constant dense<0.000000e+00> : vector<16x32xf32>
    %94 = tpu.matmul %92, %93, %cst_44 {dimension_numbers = #tpu.dot_dimension_numbers<[1], [0], [0], [1], [0, 0, 1, 1], [], []>} : vector<16x16xbf16>, vector<16x32xbf16>, vector<16x32xf32> -> vector<16x32xf32>
    %95 = arith.addf %68, %94 : vector<16x32xf32>
    %c0_45 = arith.constant 0 : index
    %c0_46 = arith.constant 0 : index
    %c0_47 = arith.constant 0 : index
    %96 = vector.load %arg12[%c0_45, %c0_46, %c0_47] : memref<1x1x32xf32, #tpu.memory_space<vmem>>, vector<1x1x32xf32>
    %97 = vector.shape_cast %96 : vector<1x1x32xf32> to vector<1x32xf32>
    %98 = vector.broadcast %97 : vector<1x32xf32> to vector<16x32xf32>
    %99 = arith.addf %95, %98 : vector<16x32xf32>
    %100 = arith.addf %14, %99 : vector<16x32xf32>
    %cst_48 = arith.constant dense<0.000000e+00> : vector<16xf32>
    %101 = vector.multi_reduction <add>, %100, %cst_48 [1] : vector<16x32xf32> to vector<16xf32>
    %102 = vector.shape_cast %101 : vector<16xf32> to vector<16x1xf32>
    %cst_49 = arith.constant 3.200000e+01 : f32
    %103 = vector.broadcast %cst_49 : f32 to vector<16x1xf32>
    %104 = arith.divf %102, %103 : vector<16x1xf32>
    %105 = vector.broadcast %104 : vector<16x1xf32> to vector<16x32xf32>
    %106 = arith.subf %100, %105 : vector<16x32xf32>
    %107 = arith.mulf %106, %106 : vector<16x32xf32>
    %cst_50 = arith.constant dense<0.000000e+00> : vector<16xf32>
    %108 = vector.multi_reduction <add>, %107, %cst_50 [1] : vector<16x32xf32> to vector<16xf32>
    %109 = vector.shape_cast %108 : vector<16xf32> to vector<16x1xf32>
    %cst_51 = arith.constant 3.200000e+01 : f32
    %110 = vector.broadcast %cst_51 : f32 to vector<16x1xf32>
    %111 = arith.divf %109, %110 : vector<16x1xf32>
    %cst_52 = arith.constant 9.99999974E-6 : f32
    %112 = vector.broadcast %cst_52 : f32 to vector<16x1xf32>
    %113 = arith.addf %111, %112 : vector<16x1xf32>
    %114 = math.rsqrt %113 : vector<16x1xf32>
    %115 = vector.broadcast %114 : vector<16x1xf32> to vector<16x32xf32>
    %116 = arith.mulf %106, %115 : vector<16x32xf32>
    %c0_53 = arith.constant 0 : index
    %c0_54 = arith.constant 0 : index
    %c0_55 = arith.constant 0 : index
    %117 = vector.load %arg13[%c0_53, %c0_54, %c0_55] : memref<1x1x32xf32, #tpu.memory_space<vmem>>, vector<1x1x32xf32>
    %118 = vector.shape_cast %117 : vector<1x1x32xf32> to vector<1x32xf32>
    %119 = vector.broadcast %118 : vector<1x32xf32> to vector<16x32xf32>
    %120 = arith.mulf %116, %119 : vector<16x32xf32>
    %c0_56 = arith.constant 0 : index
    %c0_57 = arith.constant 0 : index
    %c0_58 = arith.constant 0 : index
    %121 = vector.load %arg14[%c0_56, %c0_57, %c0_58] : memref<1x1x32xf32, #tpu.memory_space<vmem>>, vector<1x1x32xf32>
    %122 = vector.shape_cast %121 : vector<1x1x32xf32> to vector<1x32xf32>
    %123 = vector.broadcast %122 : vector<1x32xf32> to vector<16x32xf32>
    %124 = arith.addf %120, %123 : vector<16x32xf32>
    %125 = arith.truncf %124 : vector<16x32xf32> to vector<16x32xbf16>
    %c0_59 = arith.constant 0 : index
    %c0_60 = arith.constant 0 : index
    %c0_61 = arith.constant 0 : index
    %126 = vector.load %arg15[%c0_59, %c0_60, %c0_61] : memref<1x32x64xbf16, #tpu.memory_space<vmem>>, vector<1x32x64xbf16>
    %127 = vector.shape_cast %126 : vector<1x32x64xbf16> to vector<32x64xbf16>
    %cst_62 = arith.constant dense<0.000000e+00> : vector<16x64xf32>
    %128 = tpu.matmul %125, %127, %cst_62 {dimension_numbers = #tpu.dot_dimension_numbers<[1], [0], [0], [1], [0, 0, 1, 1], [], []>} : vector<16x32xbf16>, vector<32x64xbf16>, vector<16x64xf32> -> vector<16x64xf32>
    %c0_63 = arith.constant 0 : index
    %c0_64 = arith.constant 0 : index
    %c0_65 = arith.constant 0 : index
    %129 = vector.load %arg16[%c0_63, %c0_64, %c0_65] : memref<1x1x64xf32, #tpu.memory_space<vmem>>, vector<1x1x64xf32>
    %130 = vector.shape_cast %129 : vector<1x1x64xf32> to vector<1x64xf32>
    %131 = vector.broadcast %130 : vector<1x64xf32> to vector<16x64xf32>
    %132 = arith.addf %128, %131 : vector<16x64xf32>
    %cst_66 = arith.constant 0.000000e+00 : f32
    %133 = vector.broadcast %cst_66 : f32 to vector<16x64xf32>
    %134 = arith.maximumf %132, %133 : vector<16x64xf32>
    %135 = arith.truncf %134 : vector<16x64xf32> to vector<16x64xbf16>
    %c0_67 = arith.constant 0 : index
    %c0_68 = arith.constant 0 : index
    %c0_69 = arith.constant 0 : index
    %136 = vector.load %arg17[%c0_67, %c0_68, %c0_69] : memref<1x64x32xbf16, #tpu.memory_space<vmem>>, vector<1x64x32xbf16>
    %137 = vector.shape_cast %136 : vector<1x64x32xbf16> to vector<64x32xbf16>
    %cst_70 = arith.constant dense<0.000000e+00> : vector<16x32xf32>
    %138 = tpu.matmul %135, %137, %cst_70 {dimension_numbers = #tpu.dot_dimension_numbers<[1], [0], [0], [1], [0, 0, 1, 1], [], []>} : vector<16x64xbf16>, vector<64x32xbf16>, vector<16x32xf32> -> vector<16x32xf32>
    %c0_71 = arith.constant 0 : index
    %c0_72 = arith.constant 0 : index
    %c0_73 = arith.constant 0 : index
    %139 = vector.load %arg18[%c0_71, %c0_72, %c0_73] : memref<1x1x32xf32, #tpu.memory_space<vmem>>, vector<1x1x32xf32>
    %140 = vector.shape_cast %139 : vector<1x1x32xf32> to vector<1x32xf32>
    %141 = vector.broadcast %140 : vector<1x32xf32> to vector<16x32xf32>
    %142 = arith.addf %138, %141 : vector<16x32xf32>
    %143 = arith.addf %124, %142 : vector<16x32xf32>
    %cst_74 = arith.constant dense<0.000000e+00> : vector<16xf32>
    %144 = vector.multi_reduction <add>, %143, %cst_74 [1] : vector<16x32xf32> to vector<16xf32>
    %145 = vector.shape_cast %144 : vector<16xf32> to vector<16x1xf32>
    %cst_75 = arith.constant 3.200000e+01 : f32
    %146 = vector.broadcast %cst_75 : f32 to vector<16x1xf32>
    %147 = arith.divf %145, %146 : vector<16x1xf32>
    %148 = vector.broadcast %147 : vector<16x1xf32> to vector<16x32xf32>
    %149 = arith.subf %143, %148 : vector<16x32xf32>
    %150 = arith.mulf %149, %149 : vector<16x32xf32>
    %cst_76 = arith.constant dense<0.000000e+00> : vector<16xf32>
    %151 = vector.multi_reduction <add>, %150, %cst_76 [1] : vector<16x32xf32> to vector<16xf32>
    %152 = vector.shape_cast %151 : vector<16xf32> to vector<16x1xf32>
    %cst_77 = arith.constant 3.200000e+01 : f32
    %153 = vector.broadcast %cst_77 : f32 to vector<16x1xf32>
    %154 = arith.divf %152, %153 : vector<16x1xf32>
    %cst_78 = arith.constant 9.99999974E-6 : f32
    %155 = vector.broadcast %cst_78 : f32 to vector<16x1xf32>
    %156 = arith.addf %154, %155 : vector<16x1xf32>
    %157 = math.rsqrt %156 : vector<16x1xf32>
    %158 = vector.broadcast %157 : vector<16x1xf32> to vector<16x32xf32>
    %159 = arith.mulf %149, %158 : vector<16x32xf32>
    %c0_79 = arith.constant 0 : index
    %c0_80 = arith.constant 0 : index
    %c0_81 = arith.constant 0 : index
    %160 = vector.load %arg19[%c0_79, %c0_80, %c0_81] : memref<1x1x32xf32, #tpu.memory_space<vmem>>, vector<1x1x32xf32>
    %161 = vector.shape_cast %160 : vector<1x1x32xf32> to vector<1x32xf32>
    %162 = vector.broadcast %161 : vector<1x32xf32> to vector<16x32xf32>
    %163 = arith.mulf %159, %162 : vector<16x32xf32>
    %c0_82 = arith.constant 0 : index
    %c0_83 = arith.constant 0 : index
    %c0_84 = arith.constant 0 : index
    %164 = vector.load %arg20[%c0_82, %c0_83, %c0_84] : memref<1x1x32xf32, #tpu.memory_space<vmem>>, vector<1x1x32xf32>
    %165 = vector.shape_cast %164 : vector<1x1x32xf32> to vector<1x32xf32>
    %166 = vector.broadcast %165 : vector<1x32xf32> to vector<16x32xf32>
    %167 = arith.addf %163, %166 : vector<16x32xf32>
    %c0_85 = arith.constant 0 : index
    %c0_86 = arith.constant 0 : index
    %168 = vector.load %arg22[%c0_85, %c0_86] : memref<16x32xf32, #tpu.memory_space<vmem>>, vector<16x32xf32>
    tpu.vector_store %arg22[%c0_85, %c0_86], %167 {strides = array<i32>} : memref<16x32xf32, #tpu.memory_space<vmem>>, vector<16x32xf32>,
    %169 = arith.extui %1 : i1 to i32
    %c0_i32_87 = arith.constant 0 : i32
    %170 = arith.cmpi ne, %169, %c0_i32_87 : i32
    scf.if %170 {
      %171 = vector.shape_cast %167 : vector<16x32xf32> to vector<2x8x32xf32>
      %cst_88 = arith.constant dense<0xFF800000> : vector<2x32xf32>
      %172 = vector.multi_reduction <maximumf>, %171, %cst_88 [1] : vector<2x8x32xf32> to vector<2x32xf32>
      %173 = vector.shape_cast %172 : vector<2x32xf32> to vector<2x1x32xf32>
      %c0_89 = arith.constant 0 : index
      %c0_90 = arith.constant 0 : index
      %c0_91 = arith.constant 0 : index
      %174 = vector.load %arg21[%c0_89, %c0_90, %c0_91] : memref<2x1x32xf32, #tpu.memory_space<vmem>>, vector<2x1x32xf32>
      tpu.vector_store %arg21[%c0_89, %c0_90, %c0_91], %173 {strides = array<i32>} : memref<2x1x32xf32, #tpu.memory_space<vmem>>, vector<2x1x32xf32>,
    } else {
    }
    return
  }
  func.func @transform_0(%arg0: i32, %arg1: i32) -> (i32, i32, i32) {
    %c0_i32 = arith.constant 0 : i32
    %c0_i32_0 = arith.constant 0 : i32
    %c0_i32_1 = arith.constant 0 : i32
    return %arg0, %c0_i32, %c0_i32_0 : i32, i32, i32
  }
  func.func @transform_1(%arg0: i32, %arg1: i32) -> (i32, i32, i32) {
    %c0_i32 = arith.constant 0 : i32
    %c0_i32_0 = arith.constant 0 : i32
    %c0_i32_1 = arith.constant 0 : i32
    return %arg0, %c0_i32, %c0_i32_0 : i32, i32, i32
  }
  func.func @transform_2(%arg0: i32, %arg1: i32) -> (i32, i32, i32) {
    %c0_i32 = arith.constant 0 : i32
    %c0_i32_0 = arith.constant 0 : i32
    %c0_i32_1 = arith.constant 0 : i32
    return %arg0, %c0_i32, %c0_i32_0 : i32, i32, i32
  }
  func.func @transform_3(%arg0: i32, %arg1: i32) -> (i32, i32, i32) {
    %c0_i32 = arith.constant 0 : i32
    %c0_i32_0 = arith.constant 0 : i32
    %c0_i32_1 = arith.constant 0 : i32
    return %arg1, %c0_i32, %c0_i32_0 : i32, i32, i32
  }
  func.func @transform_4(%arg0: i32, %arg1: i32) -> (i32, i32, i32) {
    %c0_i32 = arith.constant 0 : i32
    %c0_i32_0 = arith.constant 0 : i32
    %c0_i32_1 = arith.constant 0 : i32
    return %arg1, %c0_i32, %c0_i32_0 : i32, i32, i32
  }
  func.func @transform_5(%arg0: i32, %arg1: i32) -> (i32, i32, i32) {
    %c0_i32 = arith.constant 0 : i32
    %c0_i32_0 = arith.constant 0 : i32
    %c0_i32_1 = arith.constant 0 : i32
    return %arg1, %c0_i32, %c0_i32_0 : i32, i32, i32
  }
  func.func @transform_6(%arg0: i32, %arg1: i32) -> (i32, i32, i32) {
    %c0_i32 = arith.constant 0 : i32
    %c0_i32_0 = arith.constant 0 : i32
    %c0_i32_1 = arith.constant 0 : i32
    return %arg1, %c0_i32, %c0_i32_0 : i32, i32, i32
  }
  func.func @transform_7(%arg0: i32, %arg1: i32) -> (i32, i32, i32) {
    %c0_i32 = arith.constant 0 : i32
    %c0_i32_0 = arith.constant 0 : i32
    %c0_i32_1 = arith.constant 0 : i32
    return %arg1, %c0_i32, %c0_i32_0 : i32, i32, i32
  }
  func.func @transform_8(%arg0: i32, %arg1: i32) -> (i32, i32, i32) {
    %c0_i32 = arith.constant 0 : i32
    %c0_i32_0 = arith.constant 0 : i32
    %c0_i32_1 = arith.constant 0 : i32
    return %arg1, %c0_i32, %c0_i32_0 : i32, i32, i32
  }
  func.func @transform_9(%arg0: i32, %arg1: i32) -> (i32, i32, i32) {
    %c0_i32 = arith.constant 0 : i32
    %c0_i32_0 = arith.constant 0 : i32
    %c0_i32_1 = arith.constant 0 : i32
    return %arg1, %c0_i32, %c0_i32_0 : i32, i32, i32
  }
  func.func @transform_10(%arg0: i32, %arg1: i32) -> (i32, i32, i32) {
    %c0_i32 = arith.constant 0 : i32
    %c0_i32_0 = arith.constant 0 : i32
    %c0_i32_1 = arith.constant 0 : i32
    return %arg1, %c0_i32, %c0_i32_0 : i32, i32, i32
  }
  func.func @transform_11(%arg0: i32, %arg1: i32) -> (i32, i32, i32) {
    %c0_i32 = arith.constant 0 : i32
    %c0_i32_0 = arith.constant 0 : i32
    %c0_i32_1 = arith.constant 0 : i32
    return %arg1, %c0_i32, %c0_i32_0 : i32, i32, i32
  }
  func.func @transform_12(%arg0: i32, %arg1: i32) -> (i32, i32, i32) {
    %c0_i32 = arith.constant 0 : i32
    %c0_i32_0 = arith.constant 0 : i32
    %c0_i32_1 = arith.constant 0 : i32
    return %arg1, %c0_i32, %c0_i32_0 : i32, i32, i32
  }
  func.func @transform_13(%arg0: i32, %arg1: i32) -> (i32, i32, i32) {
    %c0_i32 = arith.constant 0 : i32
    %c0_i32_0 = arith.constant 0 : i32
    %c0_i32_1 = arith.constant 0 : i32
    return %arg1, %c0_i32, %c0_i32_0 : i32, i32, i32
  }
  func.func @transform_14(%arg0: i32, %arg1: i32) -> (i32, i32, i32) {
    %c0_i32 = arith.constant 0 : i32
    %c0_i32_0 = arith.constant 0 : i32
    %c0_i32_1 = arith.constant 0 : i32
    return %arg1, %c0_i32, %c0_i32_0 : i32, i32, i32
  }
  func.func @transform_15(%arg0: i32, %arg1: i32) -> (i32, i32, i32) {
    %c0_i32 = arith.constant 0 : i32
    %c0_i32_0 = arith.constant 0 : i32
    %c0_i32_1 = arith.constant 0 : i32
    return %arg1, %c0_i32, %c0_i32_0 : i32, i32, i32
  }
  func.func @transform_16(%arg0: i32, %arg1: i32) -> (i32, i32, i32) {
    %c0_i32 = arith.constant 0 : i32
    %c0_i32_0 = arith.constant 0 : i32
    %c0_i32_1 = arith.constant 0 : i32
    return %arg1, %c0_i32, %c0_i32_0 : i32, i32, i32
  }
  func.func @transform_17(%arg0: i32, %arg1: i32) -> (i32, i32, i32) {
    %c0_i32 = arith.constant 0 : i32
    %c0_i32_0 = arith.constant 0 : i32
    %c0_i32_1 = arith.constant 0 : i32
    return %arg1, %c0_i32, %c0_i32_0 : i32, i32, i32
  }
  func.func @transform_18(%arg0: i32, %arg1: i32) -> (i32, i32, i32) {
    %c0_i32 = arith.constant 0 : i32
    %c0_i32_0 = arith.constant 0 : i32
    %c0_i32_1 = arith.constant 0 : i32
    return %arg1, %c0_i32, %c0_i32_0 : i32, i32, i32
  }
  func.func @transform_19(%arg0: i32, %arg1: i32) -> (i32, i32, i32) {
    %c0_i32 = arith.constant 0 : i32
    %c0_i32_0 = arith.constant 0 : i32
    %c0_i32_1 = arith.constant 0 : i32
    return %arg0, %c0_i32, %c0_i32_0 : i32, i32, i32
  }
}

</mosaic_0001>

<llo_original>
// kernel: tpu_custom_call.1
$region0: #{tpu_custom_call.1}
  #allocation0 [shape = 'u32[]', space=smem, size = 0x4, offset = 0x4, fixed_abs, tag = 'smem constant byte address 0x4 - core index']
  #allocation1 [shape = 'u32[72,128]{1,0:T(1,128)}', space=vmem, size = 0x9000, scoped, tag = 'internal scratch']
  #allocation2 [shape = 'f32[16,32]{1,0:T(8,128)}', space=vmem, size = 0x2000, scoped, tag = 'scratch operand']
  %s0 = inlined_call_operand.vmem [shape: f32[4,8,32], index: 0, kind: input, shape index: {}]
  %s1 = inlined_call_operand.vmem [shape: f32[4,8,32], index: 1, kind: input, shape index: {}]
  %s2 = inlined_call_operand.vmem [shape: f32[4,8,32], index: 2, kind: input, shape index: {}]
  %s3 = inlined_call_operand.hbm [shape: bf16[2,32,32], index: 3, kind: input, shape index: {}]
  %s4 = inlined_call_operand.hbm [shape: bf16[2,32,32], index: 4, kind: input, shape index: {}]
  %s5 = inlined_call_operand.hbm [shape: bf16[2,32,32], index: 5, kind: input, shape index: {}]
  %s6 = inlined_call_operand.hbm [shape: bf16[2,32,32], index: 6, kind: input, shape index: {}]
  %s7 = inlined_call_operand.vmem [shape: f32[2,1,32], index: 7, kind: input, shape index: {}]
  %s8 = inlined_call_operand.vmem [shape: f32[2,1,32], index: 8, kind: input, shape index: {}]
  %s9 = inlined_call_operand.vmem [shape: f32[2,1,32], index: 9, kind: input, shape index: {}]
  %s10 = inlined_call_operand.vmem [shape: f32[2,1,32], index: 10, kind: input, shape index: {}]
  %s11 = inlined_call_operand.hbm [shape: f32[2,1,32], index: 11, kind: input, shape index: {}]
  %s12 = inlined_call_operand.vmem [shape: f32[2,1,32], index: 12, kind: input, shape index: {}]
  %s13 = inlined_call_operand.hbm [shape: bf16[2,32,64], index: 13, kind: input, shape index: {}]
  %s14 = inlined_call_operand.vmem [shape: f32[2,1,64], index: 14, kind: input, shape index: {}]
  %s15 = inlined_call_operand.vmem [shape: bf16[2,64,32], index: 15, kind: input, shape index: {}]
  %s16 = inlined_call_operand.vmem [shape: f32[2,1,32], index: 16, kind: input, shape index: {}]
  %s17 = inlined_call_operand.hbm [shape: f32[2,1,32], index: 17, kind: input, shape index: {}]
  %s18 = inlined_call_operand.vmem [shape: f32[2,1,32], index: 18, kind: input, shape index: {}]
  %s19 = inlined_call_operand.hbm [shape: f32[4,1,32], index: 19, kind: output, shape index: {}]
  %s20 = sld [smem:[#allocation0]]
  $region145: #{tpu_custom_call.1} parent=0
    _
  %s22 = ssub.s32 1, %s20
  %s23 = scalar_select 0, %s22, %s20
  $region1: #{tpu_custom_call.1} parent=0
    #allocation3 [shape = 'u8[16384]{0}', space=vmem, size = 0x4000, scoped, tag = 'input window, operand 3']
    #allocation4 [shape = 's32[2]{0}', space=sflag, size = 0x8, scoped, tag = 'scoped memory for tpu_custom_call.1']
    #allocation5 [shape = 's32[2]{0}', space=sflag, size = 0x8, scoped, tag = 'scoped memory for tpu_custom_call.1']
    #allocation6 [shape = 'u8[16384]{0}', space=vmem, size = 0x4000, scoped, tag = 'input window, operand 4']
    #allocation7 [shape = 's32[2]{0}', space=sflag, size = 0x8, scoped, tag = 'scoped memory for tpu_custom_call.1']
    #allocation8 [shape = 'u8[16384]{0}', space=vmem, size = 0x4000, scoped, tag = 'input window, operand 5']
    #allocation9 [shape = 'u8[16384]{0}', space=vmem, size = 0x4000, scoped, tag = 'input window, operand 6']
    #allocation10 [shape = 's32[2]{0}', space=sflag, size = 0x8, scoped, tag = 'scoped memory for tpu_custom_call.1']
    #allocation11 [shape = 'u8[1024]{0}', space=vmem, size = 0x400, scoped, tag = 'input window, operand 11']
    #allocation12 [shape = 'u8[16384]{0}', space=vmem, size = 0x4000, scoped, tag = 'input window, operand 13']
    #allocation13 [shape = 's32[2]{0}', space=sflag, size = 0x8, scoped, tag = 'scoped memory for tpu_custom_call.1']
    #allocation14 [shape = 'u8[1024]{0}', space=vmem, size = 0x400, scoped, tag = 'input window, operand 17']
    #allocation15 [shape = 'u8[2048]{0}', space=vmem, size = 0x800, scoped, tag = 'output window, operand 0']
    %24 = vsyncpa [#allocation4], 0
    %s25 = scalar_lea.sflag [#allocation4], 1
    %26 = vsyncpa %s25, 0
    %27 = vsyncpa [#allocation7], 0
    %s28 = scalar_lea.sflag [#allocation7], 1
    %29 = vsyncpa %s28, 0
    %30 = vsyncpa [#allocation10], 0
    %s31 = scalar_lea.sflag [#allocation10], 1
    %32 = vsyncpa %s31, 0
    %33 = vsyncpa [#allocation13], 0
    %s34 = scalar_lea.sflag [#allocation13], 1
    %35 = vsyncpa %s34, 0
    %36 = vsyncpa [#allocation5], 0
    %s37 = scalar_lea.sflag [#allocation5], 1
    %38 = vsyncpa %s37, 0
    loop: start=0, step=1, limit=6
    $region2: #{tpu_custom_call.1} parent=1 // loop_pre_header
      _
    $region3: #{tpu_custom_call.1} parent=1 // loop_header
      %s40 = sphi 0, %s44
      %p41 = scmp.ge.s32.totalorder %s40, 6
      %s47 = sphi 0, %s59
      %s48 = sphi 0, %s55
      %s49 = sphi 0, %s47
      %s50 = sphi 0, %s48
      %s51 = sphi 0, %s49
      %s52 = sphi 0, %s50
      %s62 = sphi 0, %s64
      %s65 = sphi 0, %s62
      %s66 = sphi 0, %s65
      %s82 = sphi 0, %s66
      %s88 = sphi 0, %s90
      %s91 = sphi 0, %s88
      %s92 = sphi 0, %s91
      %s108 = sphi 0, %s92
      %s114 = sphi 0, %s116
      %s117 = sphi 0, %s114
      %s118 = sphi 0, %s117
      %s134 = sphi 0, %s118
      %s140 = sphi 0, %s142
      %s143 = sphi 0, %s140
      %s144 = sphi 0, %s143
      %s160 = sphi 0, %s144
      %s166 = sphi 0, %s168
      %s169 = sphi 0, %s166
      %s170 = sphi 0, %s169
      %s186 = sphi 0, %s170
      %s192 = sphi 0, %s194
      %s195 = sphi 0, %s192
      %s196 = sphi 0, %s195
      %s212 = sphi 0, %s196
      %s218 = sphi 0, %s220
      %s221 = sphi 0, %s218
      %s222 = sphi 0, %s221
      %s238 = sphi 0, %s222
      %s244 = sphi 0, %s246
      %s247 = sphi 0, %s244
      %s248 = sphi 0, %s247
      %s264 = sphi 0, %s248
      %s270 = sphi 0, %s272
      %s273 = sphi 0, %s270
      %s274 = sphi 0, %s273
      %s290 = sphi 0, %s274
      %s296 = sphi 0, %s298
      %s299 = sphi 0, %s296
      %s300 = sphi 0, %s299
      %s316 = sphi 0, %s300
      %s322 = sphi 0, %s324
      %s325 = sphi 0, %s322
      %s326 = sphi 0, %s325
      %s342 = sphi 0, %s326
      %s348 = sphi 0, %s350
      %s351 = sphi 0, %s348
      %s352 = sphi 0, %s351
      %s368 = sphi 0, %s352
      %s374 = sphi 0, %s376
      %s377 = sphi 0, %s374
      %s378 = sphi 0, %s377
      %s394 = sphi 0, %s378
      %s400 = sphi 0, %s402
      %s403 = sphi 0, %s400
      %s404 = sphi 0, %s403
      %s420 = sphi 0, %s404
      %s426 = sphi 0, %s428
      %s429 = sphi 0, %s426
      %s430 = sphi 0, %s429
      %s446 = sphi 0, %s430
      %s452 = sphi 0, %s454
      %s455 = sphi 0, %s452
      %s456 = sphi 0, %s455
      %s472 = sphi 0, %s456
      %s478 = sphi 0, %s480
      %s481 = sphi 0, %s478
      %s482 = sphi 0, %s481
      %s498 = sphi 0, %s482
      %s504 = sphi 0, %s506
      %s507 = sphi 0, %s504
      %s508 = sphi 0, %s507
      %s524 = sphi 0, %s508
      %s530 = sphi 0, %s532
      %s533 = sphi 0, %s530
      %s534 = sphi 0, %s533
      %s550 = sphi 0, %s534
      %s556 = sphi 0, %s558
      %s559 = sphi 0, %s556
      %s560 = sphi 0, %s559
      %s576 = sphi 0, %s560
    $region4: #{tpu_custom_call.1} parent=1 // loop_header_branch
      %43 = sbr.rel (%p41) target = $region8
    $region5: #{tpu_custom_call.1} parent=1 // loop_body
      %s45 = ssub.s32 %s40, 1
      %s46 = ssub.s32 %s40, 2
      %s53 = sadd.s32 1, %s48
      %p54 = scmp.ge.s32.totalorder %s53, 2
      %s55 = scalar_select %p54, 0, %s53
      %s56 = sadd.s32 1, %s47
      %s57 = scalar_select %p54, %s56, %s47
      %p58 = scmp.ge.s32.totalorder %s57, 2
      %s59 = scalar_select %p58, 0, %s57
      %s60 = ssub.s32 %s47, %s59
      %p61 = scmp.eq.s32.totalorder %s60, 0
      %s63 = sadd.s32 %s62, 1
      %s64 = scalar_select %p61, %s62, %s63
      %p67 = pneg %p61
      %p68 = scmp.eq.s32.totalorder %s40, 3
      %p69 = por %p67, %p68
      %p70 = scmp.ne.s32.totalorder %s62, %s65
      %p71 = scmp.eq.s32.totalorder %s40, 0
      %p72 = por %p70, %p71
      %p73 = scmp.ne.s32.totalorder %s62, %s65
      %p74 = scmp.eq.s32.totalorder %s45, 3
      %p75 = por %p73, %p74
      %p76 = scmp.ne.s32.totalorder %s65, %s66
      %p77 = scmp.eq.s32.totalorder %s45, 0
      %p78 = por %p76, %p77
      %p79 = scmp.ne.s32.totalorder %s65, %s66
      %p80 = scmp.eq.s32.totalorder %s46, 3
      %p81 = por %p79, %p80
      %p83 = scmp.ne.s32.totalorder %s66, %s82
      %p84 = scmp.eq.s32.totalorder %s46, 0
      %p85 = por %p83, %p84
      %s86 = ssub.s32 %s47, %s59
      %p87 = scmp.eq.s32.totalorder %s86, 0
      %s89 = sadd.s32 %s88, 1
      %s90 = scalar_select %p87, %s88, %s89
      %p93 = pneg %p87
      %p94 = scmp.eq.s32.totalorder %s40, 3
      %p95 = por %p93, %p94
      %p96 = scmp.ne.s32.totalorder %s88, %s91
      %p97 = scmp.eq.s32.totalorder %s40, 0
      %p98 = por %p96, %p97
      %p99 = scmp.ne.s32.totalorder %s88, %s91
      %p100 = scmp.eq.s32.totalorder %s45, 3
      %p101 = por %p99, %p100
      %p102 = scmp.ne.s32.totalorder %s91, %s92
      %p103 = scmp.eq.s32.totalorder %s45, 0
      %p104 = por %p102, %p103
      %p105 = scmp.ne.s32.totalorder %s91, %s92
      %p106 = scmp.eq.s32.totalorder %s46, 3
      %p107 = por %p105, %p106
      %p109 = scmp.ne.s32.totalorder %s92, %s108
      %p110 = scmp.eq.s32.totalorder %s46, 0
      %p111 = por %p109, %p110
      %s112 = ssub.s32 %s47, %s59
      %p113 = scmp.eq.s32.totalorder %s112, 0
      %s115 = sadd.s32 %s114, 1
      %s116 = scalar_select %p113, %s114, %s115
      %p119 = pneg %p113
      %p120 = scmp.eq.s32.totalorder %s40, 3
      %p121 = por %p119, %p120
      %p122 = scmp.ne.s32.totalorder %s114, %s117
      %p123 = scmp.eq.s32.totalorder %s40, 0
      %p124 = por %p122, %p123
      %p125 = scmp.ne.s32.totalorder %s114, %s117
      %p126 = scmp.eq.s32.totalorder %s45, 3
      %p127 = por %p125, %p126
      %p128 = scmp.ne.s32.totalorder %s117, %s118
      %p129 = scmp.eq.s32.totalorder %s45, 0
      %p130 = por %p128, %p129
      %p131 = scmp.ne.s32.totalorder %s117, %s118
      %p132 = scmp.eq.s32.totalorder %s46, 3
      %p133 = por %p131, %p132
      %p135 = scmp.ne.s32.totalorder %s118, %s134
      %p136 = scmp.eq.s32.totalorder %s46, 0
      %p137 = por %p135, %p136
      %s138 = ssub.s32 %s48, %s55
      %p139 = scmp.eq.s32.totalorder %s138, 0
      %s141 = sadd.s32 %s140, 1
      %s142 = scalar_select %p139, %s140, %s141
      %p145 = pneg %p139
      %p146 = scmp.eq.s32.totalorder %s40, 3
      %p147 = por %p145, %p146
      %p148 = scmp.ne.s32.totalorder %s140, %s143
      %p149 = scmp.eq.s32.totalorder %s40, 0
      %p150 = por %p148, %p149
      %p151 = scmp.ne.s32.totalorder %s140, %s143
      %p152 = scmp.eq.s32.totalorder %s45, 3
      %p153 = por %p151, %p152
      %p154 = scmp.ne.s32.totalorder %s143, %s144
      %p155 = scmp.eq.s32.totalorder %s45, 0
      %p156 = por %p154, %p155
      %p157 = scmp.ne.s32.totalorder %s143, %s144
      %p158 = scmp.eq.s32.totalorder %s46, 3
      %p159 = por %p157, %p158
      %p161 = scmp.ne.s32.totalorder %s144, %s160
      %p162 = scmp.eq.s32.totalorder %s46, 0
      %p163 = por %p161, %p162
      %s164 = ssub.s32 %s48, %s55
      %p165 = scmp.eq.s32.totalorder %s164, 0
      %s167 = sadd.s32 %s166, 1
      %s168 = scalar_select %p165, %s166, %s167
      %p171 = pneg %p165
      %p172 = scmp.eq.s32.totalorder %s40, 3
      %p173 = por %p171, %p172
      %p174 = scmp.ne.s32.totalorder %s166, %s169
      %p175 = scmp.eq.s32.totalorder %s40, 0
      %p176 = por %p174, %p175
      %p177 = scmp.ne.s32.totalorder %s166, %s169
      %p178 = scmp.eq.s32.totalorder %s45, 3
      %p179 = por %p177, %p178
      %p180 = scmp.ne.s32.totalorder %s169, %s170
      %p181 = scmp.eq.s32.totalorder %s45, 0
      %p182 = por %p180, %p181
      %p183 = scmp.ne.s32.totalorder %s169, %s170
      %p184 = scmp.eq.s32.totalorder %s46, 3
      %p185 = por %p183, %p184
      %p187 = scmp.ne.s32.totalorder %s170, %s186
      %p188 = scmp.eq.s32.totalorder %s46, 0
      %p189 = por %p187, %p188
      %s190 = ssub.s32 %s48, %s55
      %p191 = scmp.eq.s32.totalorder %s190, 0
      %s193 = sadd.s32 %s192, 1
      %s194 = scalar_select %p191, %s192, %s193
      %p197 = pneg %p191
      %p198 = scmp.eq.s32.totalorder %s40, 3
      %p199 = por %p197, %p198
      %p200 = scmp.ne.s32.totalorder %s192, %s195
      %p201 = scmp.eq.s32.totalorder %s40, 0
      %p202 = por %p200, %p201
      %p203 = scmp.ne.s32.totalorder %s192, %s195
      %p204 = scmp.eq.s32.totalorder %s45, 3
      %p205 = por %p203, %p204
      %p206 = scmp.ne.s32.totalorder %s195, %s196
      %p207 = scmp.eq.s32.totalorder %s45, 0
      %p208 = por %p206, %p207
      %p209 = scmp.ne.s32.totalorder %s195, %s196
      %p210 = scmp.eq.s32.totalorder %s46, 3
      %p211 = por %p209, %p210
      %p213 = scmp.ne.s32.totalorder %s196, %s212
      %p214 = scmp.eq.s32.totalorder %s46, 0
      %p215 = por %p213, %p214
      %s216 = ssub.s32 %s48, %s55
      %p217 = scmp.eq.s32.totalorder %s216, 0
      %s219 = sadd.s32 %s218, 1
      %s220 = scalar_select %p217, %s218, %s219
      %p223 = pneg %p217
      %p224 = scmp.eq.s32.totalorder %s40, 3
      %p225 = por %p223, %p224
      %p226 = scmp.ne.s32.totalorder %s218, %s221
      %p227 = scmp.eq.s32.totalorder %s40, 0
      %p228 = por %p226, %p227
      %p229 = scmp.ne.s32.totalorder %s218, %s221
      %p230 = scmp.eq.s32.totalorder %s45, 3
      %p231 = por %p229, %p230
      %p232 = scmp.ne.s32.totalorder %s221, %s222
      %p233 = scmp.eq.s32.totalorder %s45, 0
      %p234 = por %p232, %p233
      %p235 = scmp.ne.s32.totalorder %s221, %s222
      %p236 = scmp.eq.s32.totalorder %s46, 3
      %p237 = por %p235, %p236
      %p239 = scmp.ne.s32.totalorder %s222, %s238
      %p240 = scmp.eq.s32.totalorder %s46, 0
      %p241 = por %p239, %p240
      %s242 = ssub.s32 %s48, %s55
      %p243 = scmp.eq.s32.totalorder %s242, 0
      %s245 = sadd.s32 %s244, 1
      %s246 = scalar_select %p243, %s244, %s245
      %p249 = pneg %p243
      %p250 = scmp.eq.s32.totalorder %s40, 3
      %p251 = por %p249, %p250
      %p252 = scmp.ne.s32.totalorder %s244, %s247
      %p253 = scmp.eq.s32.totalorder %s40, 0
      %p254 = por %p252, %p253
      %p255 = scmp.ne.s32.totalorder %s244, %s247
      %p256 = scmp.eq.s32.totalorder %s45, 3
      %p257 = por %p255, %p256
      %p258 = scmp.ne.s32.totalorder %s247, %s248
      %p259 = scmp.eq.s32.totalorder %s45, 0
      %p260 = por %p258, %p259
      %p261 = scmp.ne.s32.totalorder %s247, %s248
      %p262 = scmp.eq.s32.totalorder %s46, 3
      %p263 = por %p261, %p262
      %p265 = scmp.ne.s32.totalorder %s248, %s264
      %p266 = scmp.eq.s32.totalorder %s46, 0
      %p267 = por %p265, %p266
      %s268 = ssub.s32 %s48, %s55
      %p269 = scmp.eq.s32.totalorder %s268, 0
      %s271 = sadd.s32 %s270, 1
      %s272 = scalar_select %p269, %s270, %s271
      %p275 = pneg %p269
      %p276 = scmp.eq.s32.totalorder %s40, 3
      %p277 = por %p275, %p276
      %p278 = scmp.ne.s32.totalorder %s270, %s273
      %p279 = scmp.eq.s32.totalorder %s40, 0
      %p280 = por %p278, %p279
      %p281 = scmp.ne.s32.totalorder %s270, %s273
      %p282 = scmp.eq.s32.totalorder %s45, 3
      %p283 = por %p281, %p282
      %p284 = scmp.ne.s32.totalorder %s273, %s274
      %p285 = scmp.eq.s32.totalorder %s45, 0
      %p286 = por %p284, %p285
      %p287 = scmp.ne.s32.totalorder %s273, %s274
      %p288 = scmp.eq.s32.totalorder %s46, 3
      %p289 = por %p287, %p288
      %p291 = scmp.ne.s32.totalorder %s274, %s290
      %p292 = scmp.eq.s32.totalorder %s46, 0
      %p293 = por %p291, %p292
      %s294 = ssub.s32 %s48, %s55
      %p295 = scmp.eq.s32.totalorder %s294, 0
      %s297 = sadd.s32 %s296, 1
      %s298 = scalar_select %p295, %s296, %s297
      %p301 = pneg %p295
      %p302 = scmp.eq.s32.totalorder %s40, 3
      %p303 = por %p301, %p302
      %p304 = scmp.ne.s32.totalorder %s296, %s299
      %p305 = scmp.eq.s32.totalorder %s40, 0
      %p306 = por %p304, %p305
      %p307 = scmp.ne.s32.totalorder %s296, %s299
      %p308 = scmp.eq.s32.totalorder %s45, 3
      %p309 = por %p307, %p308
      %p310 = scmp.ne.s32.totalorder %s299, %s300
      %p311 = scmp.eq.s32.totalorder %s45, 0
      %p312 = por %p310, %p311
      %p313 = scmp.ne.s32.totalorder %s299, %s300
      %p314 = scmp.eq.s32.totalorder %s46, 3
      %p315 = por %p313, %p314
      %p317 = scmp.ne.s32.totalorder %s300, %s316
      %p318 = scmp.eq.s32.totalorder %s46, 0
      %p319 = por %p317, %p318
      %s320 = ssub.s32 %s48, %s55
      %p321 = scmp.eq.s32.totalorder %s320, 0
      %s323 = sadd.s32 %s322, 1
      %s324 = scalar_select %p321, %s322, %s323
      %p327 = pneg %p321
      %p328 = scmp.eq.s32.totalorder %s40, 3
      %p329 = por %p327, %p328
      %p330 = scmp.ne.s32.totalorder %s322, %s325
      %p331 = scmp.eq.s32.totalorder %s40, 0
      %p332 = por %p330, %p331
      %p333 = scmp.ne.s32.totalorder %s322, %s325
      %p334 = scmp.eq.s32.totalorder %s45, 3
      %p335 = por %p333, %p334
      %p336 = scmp.ne.s32.totalorder %s325, %s326
      %p337 = scmp.eq.s32.totalorder %s45, 0
      %p338 = por %p336, %p337
      %p339 = scmp.ne.s32.totalorder %s325, %s326
      %p340 = scmp.eq.s32.totalorder %s46, 3
      %p341 = por %p339, %p340
      %p343 = scmp.ne.s32.totalorder %s326, %s342
      %p344 = scmp.eq.s32.totalorder %s46, 0
      %p345 = por %p343, %p344
      %s346 = ssub.s32 %s48, %s55
      %p347 = scmp.eq.s32.totalorder %s346, 0
      %s349 = sadd.s32 %s348, 1
      %s350 = scalar_select %p347, %s348, %s349
      %p353 = pneg %p347
      %p354 = scmp.eq.s32.totalorder %s40, 3
      %p355 = por %p353, %p354
      %p356 = scmp.ne.s32.totalorder %s348, %s351
      %p357 = scmp.eq.s32.totalorder %s40, 0
      %p358 = por %p356, %p357
      %p359 = scmp.ne.s32.totalorder %s348, %s351
      %p360 = scmp.eq.s32.totalorder %s45, 3
      %p361 = por %p359, %p360
      %p362 = scmp.ne.s32.totalorder %s351, %s352
      %p363 = scmp.eq.s32.totalorder %s45, 0
      %p364 = por %p362, %p363
      %p365 = scmp.ne.s32.totalorder %s351, %s352
      %p366 = scmp.eq.s32.totalorder %s46, 3
      %p367 = por %p365, %p366
      %p369 = scmp.ne.s32.totalorder %s352, %s368
      %p370 = scmp.eq.s32.totalorder %s46, 0
      %p371 = por %p369, %p370
      %s372 = ssub.s32 %s48, %s55
      %p373 = scmp.eq.s32.totalorder %s372, 0
      %s375 = sadd.s32 %s374, 1
      %s376 = scalar_select %p373, %s374, %s375
      %p379 = pneg %p373
      %p380 = scmp.eq.s32.totalorder %s40, 3
      %p381 = por %p379, %p380
      %p382 = scmp.ne.s32.totalorder %s374, %s377
      %p383 = scmp.eq.s32.totalorder %s40, 0
      %p384 = por %p382, %p383
      %p385 = scmp.ne.s32.totalorder %s374, %s377
      %p386 = scmp.eq.s32.totalorder %s45, 3
      %p387 = por %p385, %p386
      %p388 = scmp.ne.s32.totalorder %s377, %s378
      %p389 = scmp.eq.s32.totalorder %s45, 0
      %p390 = por %p388, %p389
      %p391 = scmp.ne.s32.totalorder %s377, %s378
      %p392 = scmp.eq.s32.totalorder %s46, 3
      %p393 = por %p391, %p392
      %p395 = scmp.ne.s32.totalorder %s378, %s394
      %p396 = scmp.eq.s32.totalorder %s46, 0
      %p397 = por %p395, %p396
      %s398 = ssub.s32 %s48, %s55
      %p399 = scmp.eq.s32.totalorder %s398, 0
      %s401 = sadd.s32 %s400, 1
      %s402 = scalar_select %p399, %s400, %s401
      %p405 = pneg %p399
      %p406 = scmp.eq.s32.totalorder %s40, 3
      %p407 = por %p405, %p406
      %p408 = scmp.ne.s32.totalorder %s400, %s403
      %p409 = scmp.eq.s32.totalorder %s40, 0
      %p410 = por %p408, %p409
      %p411 = scmp.ne.s32.totalorder %s400, %s403
      %p412 = scmp.eq.s32.totalorder %s45, 3
      %p413 = por %p411, %p412
      %p414 = scmp.ne.s32.totalorder %s403, %s404
      %p415 = scmp.eq.s32.totalorder %s45, 0
      %p416 = por %p414, %p415
      %p417 = scmp.ne.s32.totalorder %s403, %s404
      %p418 = scmp.eq.s32.totalorder %s46, 3
      %p419 = por %p417, %p418
      %p421 = scmp.ne.s32.totalorder %s404, %s420
      %p422 = scmp.eq.s32.totalorder %s46, 0
      %p423 = por %p421, %p422
      %s424 = ssub.s32 %s48, %s55
      %p425 = scmp.eq.s32.totalorder %s424, 0
      %s427 = sadd.s32 %s426, 1
      %s428 = scalar_select %p425, %s426, %s427
      %p431 = pneg %p425
      %p432 = scmp.eq.s32.totalorder %s40, 3
      %p433 = por %p431, %p432
      %p434 = scmp.ne.s32.totalorder %s426, %s429
      %p435 = scmp.eq.s32.totalorder %s40, 0
      %p436 = por %p434, %p435
      %p437 = scmp.ne.s32.totalorder %s426, %s429
      %p438 = scmp.eq.s32.totalorder %s45, 3
      %p439 = por %p437, %p438
      %p440 = scmp.ne.s32.totalorder %s429, %s430
      %p441 = scmp.eq.s32.totalorder %s45, 0
      %p442 = por %p440, %p441
      %p443 = scmp.ne.s32.totalorder %s429, %s430
      %p444 = scmp.eq.s32.totalorder %s46, 3
      %p445 = por %p443, %p444
      %p447 = scmp.ne.s32.totalorder %s430, %s446
      %p448 = scmp.eq.s32.totalorder %s46, 0
      %p449 = por %p447, %p448
      %s450 = ssub.s32 %s48, %s55
      %p451 = scmp.eq.s32.totalorder %s450, 0
      %s453 = sadd.s32 %s452, 1
      %s454 = scalar_select %p451, %s452, %s453
      %p457 = pneg %p451
      %p458 = scmp.eq.s32.totalorder %s40, 3
      %p459 = por %p457, %p458
      %p460 = scmp.ne.s32.totalorder %s452, %s455
      %p461 = scmp.eq.s32.totalorder %s40, 0
      %p462 = por %p460, %p461
      %p463 = scmp.ne.s32.totalorder %s452, %s455
      %p464 = scmp.eq.s32.totalorder %s45, 3
      %p465 = por %p463, %p464
      %p466 = scmp.ne.s32.totalorder %s455, %s456
      %p467 = scmp.eq.s32.totalorder %s45, 0
      %p468 = por %p466, %p467
      %p469 = scmp.ne.s32.totalorder %s455, %s456
      %p470 = scmp.eq.s32.totalorder %s46, 3
      %p471 = por %p469, %p470
      %p473 = scmp.ne.s32.totalorder %s456, %s472
      %p474 = scmp.eq.s32.totalorder %s46, 0
      %p475 = por %p473, %p474
      %s476 = ssub.s32 %s48, %s55
      %p477 = scmp.eq.s32.totalorder %s476, 0
      %s479 = sadd.s32 %s478, 1
      %s480 = scalar_select %p477, %s478, %s479
      %p483 = pneg %p477
      %p484 = scmp.eq.s32.totalorder %s40, 3
      %p485 = por %p483, %p484
      %p486 = scmp.ne.s32.totalorder %s478, %s481
      %p487 = scmp.eq.s32.totalorder %s40, 0
      %p488 = por %p486, %p487
      %p489 = scmp.ne.s32.totalorder %s478, %s481
      %p490 = scmp.eq.s32.totalorder %s45, 3
      %p491 = por %p489, %p490
      %p492 = scmp.ne.s32.totalorder %s481, %s482
      %p493 = scmp.eq.s32.totalorder %s45, 0
      %p494 = por %p492, %p493
      %p495 = scmp.ne.s32.totalorder %s481, %s482
      %p496 = scmp.eq.s32.totalorder %s46, 3
      %p497 = por %p495, %p496
      %p499 = scmp.ne.s32.totalorder %s482, %s498
      %p500 = scmp.eq.s32.totalorder %s46, 0
      %p501 = por %p499, %p500
      %s502 = ssub.s32 %s48, %s55
      %p503 = scmp.eq.s32.totalorder %s502, 0
      %s505 = sadd.s32 %s504, 1
      %s506 = scalar_select %p503, %s504, %s505
      %p509 = pneg %p503
      %p510 = scmp.eq.s32.totalorder %s40, 3
      %p511 = por %p509, %p510
      %p512 = scmp.ne.s32.totalorder %s504, %s507
      %p513 = scmp.eq.s32.totalorder %s40, 0
      %p514 = por %p512, %p513
      %p515 = scmp.ne.s32.totalorder %s504, %s507
      %p516 = scmp.eq.s32.totalorder %s45, 3
      %p517 = por %p515, %p516
      %p518 = scmp.ne.s32.totalorder %s507, %s508
      %p519 = scmp.eq.s32.totalorder %s45, 0
      %p520 = por %p518, %p519
      %p521 = scmp.ne.s32.totalorder %s507, %s508
      %p522 = scmp.eq.s32.totalorder %s46, 3
      %p523 = por %p521, %p522
      %p525 = scmp.ne.s32.totalorder %s508, %s524
      %p526 = scmp.eq.s32.totalorder %s46, 0
      %p527 = por %p525, %p526
      %s528 = ssub.s32 %s48, %s55
      %p529 = scmp.eq.s32.totalorder %s528, 0
      %s531 = sadd.s32 %s530, 1
      %s532 = scalar_select %p529, %s530, %s531
      %p535 = pneg %p529
      %p536 = scmp.eq.s32.totalorder %s40, 3
      %p537 = por %p535, %p536
      %p538 = scmp.ne.s32.totalorder %s530, %s533
      %p539 = scmp.eq.s32.totalorder %s40, 0
      %p540 = por %p538, %p539
      %p541 = scmp.ne.s32.totalorder %s530, %s533
      %p542 = scmp.eq.s32.totalorder %s45, 3
      %p543 = por %p541, %p542
      %p544 = scmp.ne.s32.totalorder %s533, %s534
      %p545 = scmp.eq.s32.totalorder %s45, 0
      %p546 = por %p544, %p545
      %p547 = scmp.ne.s32.totalorder %s533, %s534
      %p548 = scmp.eq.s32.totalorder %s46, 3
      %p549 = por %p547, %p548
      %p551 = scmp.ne.s32.totalorder %s534, %s550
      %p552 = scmp.eq.s32.totalorder %s46, 0
      %p553 = por %p551, %p552
      %s554 = ssub.s32 %s47, %s59
      %p555 = scmp.eq.s32.totalorder %s554, 0
      %s557 = sadd.s32 %s556, 1
      %s558 = scalar_select %p555, %s556, %s557
      %p561 = pneg %p555
      %p562 = scmp.eq.s32.totalorder %s40, 3
      %p563 = por %p561, %p562
      %p564 = scmp.ne.s32.totalorder %s556, %s559
      %p565 = scmp.eq.s32.totalorder %s40, 0
      %p566 = por %p564, %p565
      %p567 = scmp.ne.s32.totalorder %s556, %s559
      %p568 = scmp.eq.s32.totalorder %s45, 3
      %p569 = por %p567, %p568
      %p570 = scmp.ne.s32.totalorder %s559, %s560
      %p571 = scmp.eq.s32.totalorder %s45, 0
      %p572 = por %p570, %p571
      %p573 = scmp.ne.s32.totalorder %s559, %s560
      %p574 = scmp.eq.s32.totalorder %s46, 3
      %p575 = por %p573, %p574
      %p577 = scmp.ne.s32.totalorder %s560, %s576
      %p578 = scmp.eq.s32.totalorder %s46, 0
      %p579 = por %p577, %p578
      %p580 = scmp.le.s32.totalorder 1, %s40
      %p581 = scmp.lt.s32.totalorder %s40, 5
      %p582 = pnand %p580, %p581
      %p583 = pneg %p582
      // Predicated region
      $region9: #{tpu_custom_call.1} parent=5 // pred_check
        _
      $region10: #{tpu_custom_call.1} parent=5 // pred_check_branch
        %585 = sbr.rel (%p582) target = $region12
      $region11: #{tpu_custom_call.1} parent=5 // pred_region
        %s586 = ssub.s32 %s40, 1
      $region12: #{tpu_custom_call.1} parent=5 // pred_fallthru
        _
      %p587 = scmp.lt.s32.totalorder %s40, 4
      // Predicated region
      $region13: #{tpu_custom_call.1} parent=5 // pred_check
        %p588 = pneg %p587
      $region14: #{tpu_custom_call.1} parent=5 // pred_check_branch
        %590 = sbr.rel (%p588) target = $region16
      $region15: #{tpu_custom_call.1} parent=5 // pred_region
        // Predicated region
        $region17: #{tpu_custom_call.1} parent=15 // pred_check
          %p591 = pneg %p72
        $region18: #{tpu_custom_call.1} parent=15 // pred_check_branch
          %593 = sbr.rel (%p591) target = $region20
        $region19: #{tpu_custom_call.1} parent=15 // pred_region
          %s594 = smul.u32 2, %s47
          %p595 = scmp.lt.s32.totalorder %s594, 3
          %s596 = scalar_select %p595, %s594, 3
          %s597 = smul.addr %s596, 8
          %s598 = scalar_lea.vmem %s0, %s597
          %s599 = smul.u32 2, %s47
        $region20: #{tpu_custom_call.1} parent=15 // pred_fallthru
          _
        // Predicated region
        $region21: #{tpu_custom_call.1} parent=15 // pred_check
          %p600 = pneg %p98
        $region22: #{tpu_custom_call.1} parent=15 // pred_check_branch
          %602 = sbr.rel (%p600) target = $region24
        $region23: #{tpu_custom_call.1} parent=15 // pred_region
          %s603 = smul.u32 2, %s47
          %p604 = scmp.lt.s32.totalorder %s603, 3
          %s605 = scalar_select %p604, %s603, 3
          %s606 = smul.addr %s605, 8
          %s607 = scalar_lea.vmem %s1, %s606
          %s608 = smul.u32 2, %s47
        $region24: #{tpu_custom_call.1} parent=15 // pred_fallthru
          _
        // Predicated region
        $region25: #{tpu_custom_call.1} parent=15 // pred_check
          %p609 = pneg %p124
        $region26: #{tpu_custom_call.1} parent=15 // pred_check_branch
          %611 = sbr.rel (%p609) target = $region28
        $region27: #{tpu_custom_call.1} parent=15 // pred_region
          %s612 = smul.u32 2, %s47
          %p613 = scmp.lt.s32.totalorder %s612, 3
          %s614 = scalar_select %p613, %s612, 3
          %s615 = smul.addr %s614, 8
          %s616 = scalar_lea.vmem %s2, %s615
          %s617 = smul.u32 2, %s47
        $region28: #{tpu_custom_call.1} parent=15 // pred_fallthru
          _
        // Predicated region
        $region29: #{tpu_custom_call.1} parent=15 // pred_check
          %p618 = pneg %p150
        $region30: #{tpu_custom_call.1} parent=15 // pred_check_branch
          %620 = sbr.rel (%p618) target = $region32
        $region31: #{tpu_custom_call.1} parent=15 // pred_region
          %s621 = sand.u32 %s140, 1
          %s622 = scalar_lea.sflag [#allocation4], %s621
          %s623 = sand.u32 %s140, 1
          %s624 = smul.addr %s623, 16
          %s625 = scalar_lea.vmem [#allocation3], %s624
          %627 = vsyncadd %s622, 0
          %s628 = smul.addr %s48, 4
          %s629 = smul.addr %s628, 4
          %s630 = scalar_lea.hbm %s3, %s629
          %s631 = sshll.u32 %s630, 4
          %s632 = int_to_ptr.hbm [resolvable:$true] %s631
          %s633 = sshll.u32 %s625, 4
          %s634 = int_to_ptr.vmem [resolvable:$true] %s633
          %639 = dma.hbm_to_vmem [thread:$0]  %s632, 256, %s634, %s622, 64, 64, 4
        $region32: #{tpu_custom_call.1} parent=15 // pred_fallthru
          _
        // Predicated region
        $region33: #{tpu_custom_call.1} parent=15 // pred_check
          %p640 = pneg %p176
        $region34: #{tpu_custom_call.1} parent=15 // pred_check_branch
          %642 = sbr.rel (%p640) target = $region36
        $region35: #{tpu_custom_call.1} parent=15 // pred_region
          %s643 = sand.u32 %s40, 1
          %s644 = scalar_lea.sflag [#allocation7], %s643
          %s645 = sand.u32 %s166, 1
          %s646 = smul.addr %s645, 16
          %s647 = scalar_lea.vmem [#allocation6], %s646
          %649 = vsyncadd %s644, 0
          %s650 = smul.addr %s48, 4
          %s651 = smul.addr %s650, 4
          %s652 = scalar_lea.hbm %s4, %s651
          %s653 = sshll.u32 %s652, 4
          %s654 = int_to_ptr.hbm [resolvable:$true] %s653
          %s655 = sshll.u32 %s647, 4
          %s656 = int_to_ptr.vmem [resolvable:$true] %s655
          %661 = dma.hbm_to_vmem [thread:$0]  %s654, 256, %s656, %s644, 64, 64, 4
        $region36: #{tpu_custom_call.1} parent=15 // pred_fallthru
          _
        // Predicated region
        $region37: #{tpu_custom_call.1} parent=15 // pred_check
          %p662 = pneg %p202
        $region38: #{tpu_custom_call.1} parent=15 // pred_check_branch
          %664 = sbr.rel (%p662) target = $region40
        $region39: #{tpu_custom_call.1} parent=15 // pred_region
          %s665 = sand.u32 %s40, 1
          %s666 = scalar_lea.sflag [#allocation7], %s665
          %s667 = sand.u32 %s192, 1
          %s668 = smul.addr %s667, 16
          %s669 = scalar_lea.vmem [#allocation8], %s668
          %671 = vsyncadd %s666, 0
          %s672 = smul.addr %s48, 4
          %s673 = smul.addr %s672, 4
          %s674 = scalar_lea.hbm %s5, %s673
          %s675 = sshll.u32 %s674, 4
          %s676 = int_to_ptr.hbm [resolvable:$true] %s675
          %s677 = sshll.u32 %s669, 4
          %s678 = int_to_ptr.vmem [resolvable:$true] %s677
          %683 = dma.hbm_to_vmem [thread:$0]  %s676, 256, %s678, %s666, 64, 64, 4
        $region40: #{tpu_custom_call.1} parent=15 // pred_fallthru
          _
        // Predicated region
        $region41: #{tpu_custom_call.1} parent=15 // pred_check
          %p684 = pneg %p228
        $region42: #{tpu_custom_call.1} parent=15 // pred_check_branch
          %686 = sbr.rel (%p684) target = $region44
        $region43: #{tpu_custom_call.1} parent=15 // pred_region
          %s687 = sand.u32 %s40, 1
          %s688 = scalar_lea.sflag [#allocation10], %s687
          %s689 = sand.u32 %s218, 1
          %s690 = smul.addr %s689, 16
          %s691 = scalar_lea.vmem [#allocation9], %s690
          %693 = vsyncadd %s688, 0
          %s694 = smul.addr %s48, 4
          %s695 = smul.addr %s694, 4
          %s696 = scalar_lea.hbm %s6, %s695
          %s697 = sshll.u32 %s696, 4
          %s698 = int_to_ptr.hbm [resolvable:$true] %s697
          %s699 = sshll.u32 %s691, 4
          %s700 = int_to_ptr.vmem [resolvable:$true] %s699
          %705 = dma.hbm_to_vmem [thread:$0]  %s698, 256, %s700, %s688, 64, 64, 4
        $region44: #{tpu_custom_call.1} parent=15 // pred_fallthru
          _
        // Predicated region
        $region45: #{tpu_custom_call.1} parent=15 // pred_check
          %p706 = pneg %p254
        $region46: #{tpu_custom_call.1} parent=15 // pred_check_branch
          %708 = sbr.rel (%p706) target = $region48
        $region47: #{tpu_custom_call.1} parent=15 // pred_region
          %p709 = scmp.lt.s32.totalorder %s48, 1
          %s710 = scalar_select %p709, %s48, 1
          %s711 = scalar_lea.vmem %s7, %s710
        $region48: #{tpu_custom_call.1} parent=15 // pred_fallthru
          _
        // Predicated region
        $region49: #{tpu_custom_call.1} parent=15 // pred_check
          %p712 = pneg %p280
        $region50: #{tpu_custom_call.1} parent=15 // pred_check_branch
          %714 = sbr.rel (%p712) target = $region52
        $region51: #{tpu_custom_call.1} parent=15 // pred_region
          %p715 = scmp.lt.s32.totalorder %s48, 1
          %s716 = scalar_select %p715, %s48, 1
          %s717 = scalar_lea.vmem %s8, %s716
        $region52: #{tpu_custom_call.1} parent=15 // pred_fallthru
          _
        // Predicated region
        $region53: #{tpu_custom_call.1} parent=15 // pred_check
          %p718 = pneg %p306
        $region54: #{tpu_custom_call.1} parent=15 // pred_check_branch
          %720 = sbr.rel (%p718) target = $region56
        $region55: #{tpu_custom_call.1} parent=15 // pred_region
          %p721 = scmp.lt.s32.totalorder %s48, 1
          %s722 = scalar_select %p721, %s48, 1
          %s723 = scalar_lea.vmem %s9, %s722
        $region56: #{tpu_custom_call.1} parent=15 // pred_fallthru
          _
        // Predicated region
        $region57: #{tpu_custom_call.1} parent=15 // pred_check
          %p724 = pneg %p332
        $region58: #{tpu_custom_call.1} parent=15 // pred_check_branch
          %726 = sbr.rel (%p724) target = $region60
        $region59: #{tpu_custom_call.1} parent=15 // pred_region
          %p727 = scmp.lt.s32.totalorder %s48, 1
          %s728 = scalar_select %p727, %s48, 1
          %s729 = scalar_lea.vmem %s10, %s728
        $region60: #{tpu_custom_call.1} parent=15 // pred_fallthru
          _
        // Predicated region
        $region61: #{tpu_custom_call.1} parent=15 // pred_check
          %p730 = pneg %p358
        $region62: #{tpu_custom_call.1} parent=15 // pred_check_branch
          %732 = sbr.rel (%p730) target = $region64
        $region63: #{tpu_custom_call.1} parent=15 // pred_region
          %s733 = sand.u32 %s40, 1
          %s734 = scalar_lea.sflag [#allocation10], %s733
          %s735 = sand.u32 %s348, 1
          %s736 = scalar_lea.vmem [#allocation11], %s735
          %738 = vsyncadd %s734, 0
          %s739 = scalar_lea.hbm %s11, %s48
          %s741 = sshll.u32 %s739, 4
          %s742 = int_to_ptr.hbm [resolvable:$true] %s741
          %s743 = sshll.u32 %s736, 4
          %s744 = int_to_ptr.vmem [resolvable:$true] %s743
          %746 = dma.hbm_to_vmem [thread:$0]  %s742, 16, %s744, %s734
        $region64: #{tpu_custom_call.1} parent=15 // pred_fallthru
          _
        // Predicated region
        $region65: #{tpu_custom_call.1} parent=15 // pred_check
          %p747 = pneg %p384
        $region66: #{tpu_custom_call.1} parent=15 // pred_check_branch
          %749 = sbr.rel (%p747) target = $region68
        $region67: #{tpu_custom_call.1} parent=15 // pred_region
          %p750 = scmp.lt.s32.totalorder %s48, 1
          %s751 = scalar_select %p750, %s48, 1
          %s752 = scalar_lea.vmem %s12, %s751
        $region68: #{tpu_custom_call.1} parent=15 // pred_fallthru
          _
        // Predicated region
        $region69: #{tpu_custom_call.1} parent=15 // pred_check
          %p753 = pneg %p410
        $region70: #{tpu_custom_call.1} parent=15 // pred_check_branch
          %755 = sbr.rel (%p753) target = $region72
        $region71: #{tpu_custom_call.1} parent=15 // pred_region
          %s756 = sand.u32 %s40, 1
          %s757 = scalar_lea.sflag [#allocation13], %s756
          %s758 = sand.u32 %s400, 1
          %s759 = smul.addr %s758, 16
          %s760 = scalar_lea.vmem [#allocation12], %s759
          %762 = vsyncadd %s757, 0
          %s763 = smul.addr %s48, 4
          %s764 = smul.addr %s763, 4
          %s765 = scalar_lea.hbm %s13, %s764
          %s766 = sshll.u32 %s765, 4
          %s767 = int_to_ptr.hbm [resolvable:$true] %s766
          %s768 = sshll.u32 %s760, 4
          %s769 = int_to_ptr.vmem [resolvable:$true] %s768
          %774 = dma.hbm_to_vmem [thread:$0]  %s767, 256, %s769, %s757, 64, 64, 4
        $region72: #{tpu_custom_call.1} parent=15 // pred_fallthru
          _
        // Predicated region
        $region73: #{tpu_custom_call.1} parent=15 // pred_check
          %p775 = pneg %p436
        $region74: #{tpu_custom_call.1} parent=15 // pred_check_branch
          %777 = sbr.rel (%p775) target = $region76
        $region75: #{tpu_custom_call.1} parent=15 // pred_region
          %p778 = scmp.lt.s32.totalorder %s48, 1
          %s779 = scalar_select %p778, %s48, 1
          %s780 = scalar_lea.vmem %s14, %s779
        $region76: #{tpu_custom_call.1} parent=15 // pred_fallthru
          _
        // Predicated region
        $region77: #{tpu_custom_call.1} parent=15 // pred_check
          %p781 = pneg %p462
        $region78: #{tpu_custom_call.1} parent=15 // pred_check_branch
          %783 = sbr.rel (%p781) target = $region80
        $region79: #{tpu_custom_call.1} parent=15 // pred_region
          %p784 = scmp.lt.s32.totalorder %s48, 1
          %s785 = scalar_select %p784, %s48, 1
          %s786 = smul.addr %s785, 8
          %s787 = smul.addr %s786, 4
          %s788 = scalar_lea.vmem %s15, %s787
        $region80: #{tpu_custom_call.1} parent=15 // pred_fallthru
          _
        // Predicated region
        $region81: #{tpu_custom_call.1} parent=15 // pred_check
          %p789 = pneg %p488
        $region82: #{tpu_custom_call.1} parent=15 // pred_check_branch
          %791 = sbr.rel (%p789) target = $region84
        $region83: #{tpu_custom_call.1} parent=15 // pred_region
          %p792 = scmp.lt.s32.totalorder %s48, 1
          %s793 = scalar_select %p792, %s48, 1
          %s794 = scalar_lea.vmem %s16, %s793
        $region84: #{tpu_custom_call.1} parent=15 // pred_fallthru
          _
        // Predicated region
        $region85: #{tpu_custom_call.1} parent=15 // pred_check
          %p795 = pneg %p514
        $region86: #{tpu_custom_call.1} parent=15 // pred_check_branch
          %797 = sbr.rel (%p795) target = $region88
        $region87: #{tpu_custom_call.1} parent=15 // pred_region
          %s798 = sand.u32 %s40, 1
          %s799 = scalar_lea.sflag [#allocation13], %s798
          %s800 = sand.u32 %s504, 1
          %s801 = scalar_lea.vmem [#allocation14], %s800
          %803 = vsyncadd %s799, 0
          %s804 = scalar_lea.hbm %s17, %s48
          %s806 = sshll.u32 %s804, 4
          %s807 = int_to_ptr.hbm [resolvable:$true] %s806
          %s808 = sshll.u32 %s801, 4
          %s809 = int_to_ptr.vmem [resolvable:$true] %s808
          %811 = dma.hbm_to_vmem [thread:$0]  %s807, 16, %s809, %s799
        $region88: #{tpu_custom_call.1} parent=15 // pred_fallthru
          _
        // Predicated region
        $region89: #{tpu_custom_call.1} parent=15 // pred_check
          %p812 = pneg %p540
        $region90: #{tpu_custom_call.1} parent=15 // pred_check_branch
          %814 = sbr.rel (%p812) target = $region92
        $region91: #{tpu_custom_call.1} parent=15 // pred_region
          %p815 = scmp.lt.s32.totalorder %s48, 1
          %s816 = scalar_select %p815, %s48, 1
          %s817 = scalar_lea.vmem %s18, %s816
        $region92: #{tpu_custom_call.1} parent=15 // pred_fallthru
          _
      $region16: #{tpu_custom_call.1} parent=5 // pred_fallthru
        _
      %p818 = scmp.le.s32.totalorder 1, %s40
      %p819 = scmp.lt.s32.totalorder %s40, 5
      %p820 = pnand %p818, %p819
      %p821 = pneg %p820
      // Predicated region
      $region93: #{tpu_custom_call.1} parent=5 // pred_check
        _
      $region94: #{tpu_custom_call.1} parent=5 // pred_check_branch
        %823 = sbr.rel (%p820) target = $region96
      $region95: #{tpu_custom_call.1} parent=5 // pred_region
        %s824 = ssub.s32 %s40, 1
        %s825 = sand.u32 %s143, 1
        %s826 = scalar_lea.sflag [#allocation4], %s825
        %s827 = sand.u32 %s143, 1
        %s828 = smul.addr %s827, 16
        %s829 = scalar_lea.vmem [#allocation3], %s828
        // Predicated region
        $region97: #{tpu_custom_call.1} parent=95 // pred_check
          %p830 = pneg %p156
        $region98: #{tpu_custom_call.1} parent=95 // pred_check_branch
          %832 = sbr.rel (%p830) target = $region100
        $region99: #{tpu_custom_call.1} parent=95 // pred_region
          %834 = dma.done %s826, 256
        $region100: #{tpu_custom_call.1} parent=95 // pred_fallthru
          _
        %s835 = sand.u32 %s45, 1
        %s836 = scalar_lea.sflag [#allocation7], %s835
        %s837 = sand.u32 %s169, 1
        %s838 = smul.addr %s837, 16
        %s839 = scalar_lea.vmem [#allocation6], %s838
        // Predicated region
        $region101: #{tpu_custom_call.1} parent=95 // pred_check
          %p840 = pneg %p182
        $region102: #{tpu_custom_call.1} parent=95 // pred_check_branch
          %842 = sbr.rel (%p840) target = $region104
        $region103: #{tpu_custom_call.1} parent=95 // pred_region
          %844 = dma.done %s836, 256
        $region104: #{tpu_custom_call.1} parent=95 // pred_fallthru
          _
        %s845 = sand.u32 %s45, 1
        %s846 = scalar_lea.sflag [#allocation7], %s845
        %s847 = sand.u32 %s195, 1
        %s848 = smul.addr %s847, 16
        %s849 = scalar_lea.vmem [#allocation8], %s848
        // Predicated region
        $region105: #{tpu_custom_call.1} parent=95 // pred_check
          %p850 = pneg %p208
        $region106: #{tpu_custom_call.1} parent=95 // pred_check_branch
          %852 = sbr.rel (%p850) target = $region108
        $region107: #{tpu_custom_call.1} parent=95 // pred_region
          %854 = dma.done %s846, 256
        $region108: #{tpu_custom_call.1} parent=95 // pred_fallthru
          _
        %s855 = sand.u32 %s45, 1
        %s856 = scalar_lea.sflag [#allocation10], %s855
        %s857 = sand.u32 %s221, 1
        %s858 = smul.addr %s857, 16
        %s859 = scalar_lea.vmem [#allocation9], %s858
        // Predicated region
        $region109: #{tpu_custom_call.1} parent=95 // pred_check
          %p860 = pneg %p234
        $region110: #{tpu_custom_call.1} parent=95 // pred_check_branch
          %862 = sbr.rel (%p860) target = $region112
        $region111: #{tpu_custom_call.1} parent=95 // pred_region
          %864 = dma.done %s856, 256
        $region112: #{tpu_custom_call.1} parent=95 // pred_fallthru
          _
        %s865 = sand.u32 %s45, 1
        %s866 = scalar_lea.sflag [#allocation10], %s865
        %s867 = sand.u32 %s351, 1
        %s868 = scalar_lea.vmem [#allocation11], %s867
        // Predicated region
        $region113: #{tpu_custom_call.1} parent=95 // pred_check
          %p869 = pneg %p364
        $region114: #{tpu_custom_call.1} parent=95 // pred_check_branch
          %871 = sbr.rel (%p869) target = $region116
        $region115: #{tpu_custom_call.1} parent=95 // pred_region
          %873 = dma.done %s866, 16
        $region116: #{tpu_custom_call.1} parent=95 // pred_fallthru
          _
        %s874 = sand.u32 %s45, 1
        %s875 = scalar_lea.sflag [#allocation13], %s874
        %s876 = sand.u32 %s403, 1
        %s877 = smul.addr %s876, 16
        %s878 = scalar_lea.vmem [#allocation12], %s877
        // Predicated region
        $region117: #{tpu_custom_call.1} parent=95 // pred_check
          %p879 = pneg %p416
        $region118: #{tpu_custom_call.1} parent=95 // pred_check_branch
          %881 = sbr.rel (%p879) target = $region120
        $region119: #{tpu_custom_call.1} parent=95 // pred_region
          %883 = dma.done %s875, 256
        $region120: #{tpu_custom_call.1} parent=95 // pred_fallthru
          _
        %s884 = sand.u32 %s45, 1
        %s885 = scalar_lea.sflag [#allocation13], %s884
        %s886 = sand.u32 %s507, 1
        %s887 = scalar_lea.vmem [#allocation14], %s886
        // Predicated region
        $region121: #{tpu_custom_call.1} parent=95 // pred_check
          %p888 = pneg %p520
        $region122: #{tpu_custom_call.1} parent=95 // pred_check_branch
          %890 = sbr.rel (%p888) target = $region124
        $region123: #{tpu_custom_call.1} parent=95 // pred_region
          %892 = dma.done %s885, 16
        $region124: #{tpu_custom_call.1} parent=95 // pred_fallthru
          _
        %s893 = smul.u32 2, %s49
        %p894 = scmp.lt.s32.totalorder %s893, 3
        %s895 = scalar_select %p894, %s893, 3
        %s896 = smul.addr %s895, 8
        %s897 = scalar_lea.vmem %s0, %s896
        %p898 = pneg %p78
        %p899 = pneg %p75
        %s900 = smul.u32 2, %s49
        %p901 = scmp.lt.s32.totalorder %s900, 3
        %s902 = scalar_select %p901, %s900, 3
        %s903 = smul.addr %s902, 8
        %s904 = scalar_lea.vmem %s1, %s903
        %p905 = pneg %p104
        %p906 = pneg %p101
        %s907 = smul.u32 2, %s49
        %p908 = scmp.lt.s32.totalorder %s907, 3
        %s909 = scalar_select %p908, %s907, 3
        %s910 = smul.addr %s909, 8
        %s911 = scalar_lea.vmem %s2, %s910
        %p912 = pneg %p130
        %p913 = pneg %p127
        %s914 = sand.u32 %s143, 1
        %s915 = scalar_lea.sflag [#allocation4], %s914
        %s916 = sand.u32 %s143, 1
        %s917 = smul.addr %s916, 16
        %s918 = scalar_lea.vmem [#allocation3], %s917
        %p919 = pneg %p156
        %p920 = pneg %p153
        %s921 = sand.u32 %s45, 1
        %s922 = scalar_lea.sflag [#allocation7], %s921
        %s923 = sand.u32 %s169, 1
        %s924 = smul.addr %s923, 16
        %s925 = scalar_lea.vmem [#allocation6], %s924
        %p926 = pneg %p182
        %p927 = pneg %p179
        %s928 = sand.u32 %s45, 1
        %s929 = scalar_lea.sflag [#allocation7], %s928
        %s930 = sand.u32 %s195, 1
        %s931 = smul.addr %s930, 16
        %s932 = scalar_lea.vmem [#allocation8], %s931
        %p933 = pneg %p208
        %p934 = pneg %p205
        %s935 = sand.u32 %s45, 1
        %s936 = scalar_lea.sflag [#allocation10], %s935
        %s937 = sand.u32 %s221, 1
        %s938 = smul.addr %s937, 16
        %s939 = scalar_lea.vmem [#allocation9], %s938
        %p940 = pneg %p234
        %p941 = pneg %p231
        %p942 = scmp.lt.s32.totalorder %s50, 1
        %s943 = scalar_select %p942, %s50, 1
        %s944 = scalar_lea.vmem %s7, %s943
        %p945 = pneg %p260
        %p946 = pneg %p257
        %p947 = scmp.lt.s32.totalorder %s50, 1
        %s948 = scalar_select %p947, %s50, 1
        %s949 = scalar_lea.vmem %s8, %s948
        %p950 = pneg %p286
        %p951 = pneg %p283
        %p952 = scmp.lt.s32.totalorder %s50, 1
        %s953 = scalar_select %p952, %s50, 1
        %s954 = scalar_lea.vmem %s9, %s953
        %p955 = pneg %p312
        %p956 = pneg %p309
        %p957 = scmp.lt.s32.totalorder %s50, 1
        %s958 = scalar_select %p957, %s50, 1
        %s959 = scalar_lea.vmem %s10, %s958
        %p960 = pneg %p338
        %p961 = pneg %p335
        %s962 = sand.u32 %s45, 1
        %s963 = scalar_lea.sflag [#allocation10], %s962
        %s964 = sand.u32 %s351, 1
        %s965 = scalar_lea.vmem [#allocation11], %s964
        %p966 = pneg %p364
        %p967 = pneg %p361
        %p968 = scmp.lt.s32.totalorder %s50, 1
        %s969 = scalar_select %p968, %s50, 1
        %s970 = scalar_lea.vmem %s12, %s969
        %p971 = pneg %p390
        %p972 = pneg %p387
        %s973 = sand.u32 %s45, 1
        %s974 = scalar_lea.sflag [#allocation13], %s973
        %s975 = sand.u32 %s403, 1
        %s976 = smul.addr %s975, 16
        %s977 = scalar_lea.vmem [#allocation12], %s976
        %p978 = pneg %p416
        %p979 = pneg %p413
        %p980 = scmp.lt.s32.totalorder %s50, 1
        %s981 = scalar_select %p980, %s50, 1
        %s982 = scalar_lea.vmem %s14, %s981
        %p983 = pneg %p442
        %p984 = pneg %p439
        %p985 = scmp.lt.s32.totalorder %s50, 1
        %s986 = scalar_select %p985, %s50, 1
        %s987 = smul.addr %s986, 8
        %s988 = smul.addr %s987, 4
        %s989 = scalar_lea.vmem %s15, %s988
        %p990 = pneg %p468
        %p991 = pneg %p465
        %p992 = scmp.lt.s32.totalorder %s50, 1
        %s993 = scalar_select %p992, %s50, 1
        %s994 = scalar_lea.vmem %s16, %s993
        %p995 = pneg %p494
        %p996 = pneg %p491
        %s997 = sand.u32 %s45, 1
        %s998 = scalar_lea.sflag [#allocation13], %s997
        %s999 = sand.u32 %s507, 1
        %s1000 = scalar_lea.vmem [#allocation14], %s999
        %p1001 = pneg %p520
        %p1002 = pneg %p517
        %p1003 = scmp.lt.s32.totalorder %s50, 1
        %s1004 = scalar_select %p1003, %s50, 1
        %s1005 = scalar_lea.vmem %s18, %s1004
        %p1006 = pneg %p546
        %p1007 = pneg %p543
        %p1008 = pneg %p572
        %p1009 = pneg %p569
        %s1010 = sand.u32 %s559, 1
        %s1011 = scalar_lea.sflag [#allocation5], %s1010
        %s1012 = sand.u32 %s559, 1
        %s1013 = smul.addr %s1012, 2
        %s1014 = scalar_lea.vmem [#allocation15], %s1013
        %s1015 = smul.u32 2, %s49
        %p1016 = scmp.lt.s32.totalorder %s1015, 3
        %s1017 = scalar_select %p1016, %s1015, 3
        %s1018 = smul.addr %s1017, 8
        %s1019 = scalar_lea.vmem %s0, %s1018
        %s1020 = smul.u32 2, %s49
        %s1021 = smul.u32 2, %s49
        %p1022 = scmp.lt.s32.totalorder %s1021, 3
        %s1023 = scalar_select %p1022, %s1021, 3
        %s1024 = smul.addr %s1023, 8
        %s1025 = scalar_lea.vmem %s1, %s1024
        %s1026 = smul.u32 2, %s49
        %s1027 = smul.u32 2, %s49
        %p1028 = scmp.lt.s32.totalorder %s1027, 3
        %s1029 = scalar_select %p1028, %s1027, 3
        %s1030 = smul.addr %s1029, 8
        %s1031 = scalar_lea.vmem %s2, %s1030
        %s1032 = smul.u32 2, %s49
        %p1033 = scmp.lt.s32.totalorder %s50, 1
        %s1034 = scalar_select %p1033, %s50, 1
        %s1035 = scalar_lea.vmem %s7, %s1034
        %p1036 = scmp.lt.s32.totalorder %s50, 1
        %s1037 = scalar_select %p1036, %s50, 1
        %s1038 = scalar_lea.vmem %s8, %s1037
        %p1039 = scmp.lt.s32.totalorder %s50, 1
        %s1040 = scalar_select %p1039, %s50, 1
        %s1041 = scalar_lea.vmem %s9, %s1040
        %p1042 = scmp.lt.s32.totalorder %s50, 1
        %s1043 = scalar_select %p1042, %s50, 1
        %s1044 = scalar_lea.vmem %s10, %s1043
        %p1045 = scmp.lt.s32.totalorder %s50, 1
        %s1046 = scalar_select %p1045, %s50, 1
        %s1047 = scalar_lea.vmem %s12, %s1046
        %p1048 = scmp.lt.s32.totalorder %s50, 1
        %s1049 = scalar_select %p1048, %s50, 1
        %s1050 = scalar_lea.vmem %s14, %s1049
        %p1051 = scmp.lt.s32.totalorder %s50, 1
        %s1052 = scalar_select %p1051, %s50, 1
        %s1053 = smul.addr %s1052, 8
        %s1054 = smul.addr %s1053, 4
        %s1055 = scalar_lea.vmem %s15, %s1054
        %p1056 = scmp.lt.s32.totalorder %s50, 1
        %s1057 = scalar_select %p1056, %s50, 1
        %s1058 = scalar_lea.vmem %s16, %s1057
        %p1059 = scmp.lt.s32.totalorder %s50, 1
        %s1060 = scalar_select %p1059, %s50, 1
        %s1061 = scalar_lea.vmem %s18, %s1060
        %s1062 = smul.u32 2, %s49
        %p1064 = scmp.eq.s32.totalorder %s50, 0
        %p1065 = scmp.eq.s32.totalorder %s50, 1
        // Predicated region
        $region125: #{tpu_custom_call.1} parent=95 // pred_check
          %p1066 = pneg %p1064
        $region126: #{tpu_custom_call.1} parent=95 // pred_check_branch
          %1068 = sbr.rel (%p1066) target = $region128
        $region127: #{tpu_custom_call.1} parent=95 // pred_region
          %vm1069 = vcmask 261120
          %1070 = vst.msk [vmem:[#allocation2] sm:$0xff] %vm1069, 0.0
          %1071 = vst.msk [vmem:[#allocation2 + $0x8] sm:$0xff] %vm1069, 0.0
        $region128: #{tpu_custom_call.1} parent=95 // pred_fallthru
          _
        %v1072 = vld [vmem:[#allocation2] sm:$0xff]
        %v1073 = vld [vmem:[#allocation2 + $0x8] sm:$0xff]
        %v1074 = vld [vmem:[%s1019] sm:$0xff]
        %v1075 = vld [vmem:[%s1019 + $0x8] sm:$0xff]
        %v1076 = vld [vmem:[%s1025] sm:$0xff]
        %v1077 = vld [vmem:[%s1025 + $0x8] sm:$0xff]
        %v1078 = vld [vmem:[%s1031] sm:$0xff]
        %v1079 = vld [vmem:[%s1031 + $0x8] sm:$0xff]
        %v1080 = vstv %s50
        %vm1081 = vcmp.eq.s32.totalorder %v1080, 0
        %v1082 = vsel %vm1081, %v1074, %v1072
        %v1083 = vsel %vm1081, %v1075, %v1073
        %v1084 = vsel %vm1081, %v1076, %v1072
        %v1085 = vsel %vm1081, %v1077, %v1073
        %v1086 = vsel %vm1081, %v1078, %v1072
        %v1087 = vsel %vm1081, %v1079, %v1073
        %v1088 = vpack.c.bf16 %v1083, %v1082
        %v1089 = vld [vmem:[%s829] sm:$0xf]
        %v1090 = vld [vmem:[%s829 + $0x4] sm:$0xf]
        %v1091 = vld [vmem:[%s829 + $0x8] sm:$0xf]
        %v1092 = vld [vmem:[%s829 + $0xc] sm:$0xf]
        %v1093 = vld [vmem:[%s1035] sm:$0x1]
        %v1095 = vperm.slane %v1093, 0
        %v1101 = vunpack.c.l.b16 %v1089
        %v1102 = vunpack.c.l.b16 %v1090
        %v1103 = vunpack.c.l.b16 %v1091
        %v1104 = vunpack.c.l.b16 %v1092
        %v1105 = vpack.c.b16 %v1102, %v1101
        %v1106 = vpack.c.b16 %v1104, %v1103
        %vm1109 = vcmask 261120
        %v1111 = vsel %vm1109, %v1088, 0
        %1113 = vmatpush.bf16.msra.mxu0 0
        %1114 = vmatpush.bf16.msra.mxu0 0
        %1115 = vmatpush.bf16.msra.mxu0 0
        %1116 = vmatpush.bf16.msra.mxu0 0
        %1117 = vmatpush.bf16.msra.mxu0 0
        %1118 = vmatpush.bf16.msra.mxu0 0
        %1119 = vmatpush.bf16.msra.mxu0 %v1106
        %1120 = vmatpush.bf16.msra.mxu0 %v1105
        %1121 = vmatmul.bf16.gmra.mxu0 %v1111
        %v1122 = vpop.f32.mrf.mxu0
        %v1123 = vadd.f32 %v1095, %v1122
        %v1124 = vpop.f32.mrf.mxu0
        %v1125 = vadd.f32 %v1095, %v1124
        %1126 = vdwg.mxu0
        %v1127 = vpack.c.bf16 %v1085, %v1084
        %v1128 = vld [vmem:[%s839] sm:$0xf]
        %v1129 = vld [vmem:[%s839 + $0x4] sm:$0xf]
        %v1130 = vld [vmem:[%s839 + $0x8] sm:$0xf]
        %v1131 = vld [vmem:[%s839 + $0xc] sm:$0xf]
        %v1132 = vld [vmem:[%s1038] sm:$0x1]
        %v1134 = vperm.slane %v1132, 0
        %v1140 = vunpack.c.l.b16 %v1128
        %v1141 = vunpack.c.l.b16 %v1129
        %v1142 = vunpack.c.l.b16 %v1130
        %v1143 = vunpack.c.l.b16 %v1131
        %v1144 = vpack.c.b16 %v1141, %v1140
        %v1145 = vpack.c.b16 %v1143, %v1142
        %v1149 = vsel %vm1109, %v1127, 0
        %1151 = vmatpush.bf16.msra.mxu0 0
        %1152 = vmatpush.bf16.msra.mxu0 0
        %1153 = vmatpush.bf16.msra.mxu0 0
        %1154 = vmatpush.bf16.msra.mxu0 0
        %1155 = vmatpush.bf16.msra.mxu0 0
        %1156 = vmatpush.bf16.msra.mxu0 0
        %1157 = vmatpush.bf16.msra.mxu0 %v1145
        %1158 = vmatpush.bf16.msra.mxu0 %v1144
        %1159 = vmatmul.bf16.gmra.mxu0 %v1149
        %v1160 = vpop.f32.mrf.mxu0
        %v1161 = vadd.f32 %v1134, %v1160
        %v1162 = vpop.f32.mrf.mxu0
        %v1163 = vadd.f32 %v1134, %v1162
        %1164 = vdwg.mxu0
        %v1165 = vpack.c.bf16 %v1087, %v1086
        %v1166 = vld [vmem:[%s849] sm:$0xf]
        %v1167 = vld [vmem:[%s849 + $0x4] sm:$0xf]
        %v1168 = vld [vmem:[%s849 + $0x8] sm:$0xf]
        %v1169 = vld [vmem:[%s849 + $0xc] sm:$0xf]
        %v1170 = vld [vmem:[%s1041] sm:$0x1]
        %v1172 = vperm.slane %v1170, 0
        %v1178 = vunpack.c.l.b16 %v1166
        %v1179 = vunpack.c.l.b16 %v1167
        %v1180 = vunpack.c.l.b16 %v1168
        %v1181 = vunpack.c.l.b16 %v1169
        %v1182 = vpack.c.b16 %v1179, %v1178
        %v1183 = vpack.c.b16 %v1181, %v1180
        %v1187 = vsel %vm1109, %v1165, 0
        %1189 = vmatpush.bf16.msra.mxu0 0
        %1190 = vmatpush.bf16.msra.mxu0 0
        %1191 = vmatpush.bf16.msra.mxu0 0
        %1192 = vmatpush.bf16.msra.mxu0 0
        %1193 = vmatpush.bf16.msra.mxu0 0
        %1194 = vmatpush.bf16.msra.mxu0 0
        %1195 = vmatpush.bf16.msra.mxu0 %v1183
        %1196 = vmatpush.bf16.msra.mxu0 %v1182
        %1197 = vmatmul.bf16.gmra.mxu0 %v1187
        %v1198 = vpop.f32.mrf.mxu0
        %v1199 = vadd.f32 %v1172, %v1198
        %v1200 = vpop.f32.mrf.mxu0
        %v1201 = vadd.f32 %v1172, %v1200
        %1202 = vdwg.mxu0
        %v1203 = vld [vmem:[%s859] sm:$0xf]
        %v1204 = vld [vmem:[%s859 + $0x4] sm:$0xf]
        %v1205 = vld [vmem:[%s859 + $0x8] sm:$0xf]
        %v1206 = vld [vmem:[%s859 + $0xc] sm:$0xf]
        %v1207 = vpack.c.bf16 %v1123, %v1123
        %v1208 = vpack.c.bf16 %v1125, %v1125
        %v1209 = vpack.c.bf16 %v1161, %v1161
        %v1210 = vpack.c.bf16 %v1163, %v1163
        %vm1211 = vcmask 130048
        %v1213 = vsel %vm1211, %v1207, 0
        %v1216 = vsel %vm1211, %v1209, 0
        %1218 = vmatpush.bf16.xpose.msra.mxu0 0
        %1219 = vmatpush.bf16.xpose.msra.mxu0 0
        %1220 = vmatpush.bf16.xpose.msra.mxu0 0
        %1221 = vmatpush.bf16.xpose.msra.mxu0 0
        %1222 = vmatpush.bf16.xpose.msra.mxu0 0
        %1223 = vmatpush.bf16.xpose.msra.mxu0 0
        %1224 = vmatpush.bf16.xpose.msra.mxu0 0
        %1225 = vmatpush.bf16.xpose.msra.mxu0 %v1216
        %1226 = vmatmul.bf16.gmra.mxu0 %v1213
        %v1227 = vpop.f32.mrf.mxu0
        %v1228 = vadd.f32 0.0, %v1227
        %v1229 = vpop.f32.mrf.mxu0
        %1230 = vdwg.mxu0
        %v1232 = vsel %vm1211, %v1208, 0
        %v1235 = vsel %vm1211, %v1210, 0
        %1237 = vmatpush.bf16.xpose.msra.mxu0 0
        %1238 = vmatpush.bf16.xpose.msra.mxu0 0
        %1239 = vmatpush.bf16.xpose.msra.mxu0 0
        %1240 = vmatpush.bf16.xpose.msra.mxu0 0
        %1241 = vmatpush.bf16.xpose.msra.mxu0 0
        %1242 = vmatpush.bf16.xpose.msra.mxu0 0
        %1243 = vmatpush.bf16.xpose.msra.mxu0 0
        %1244 = vmatpush.bf16.xpose.msra.mxu0 %v1235
        %1245 = vmatmul.bf16.gmra.mxu0 %v1232
        %v1246 = vpop.f32.mrf.mxu0
        %v1247 = vadd.f32 0.0, %v1246
        %v1248 = vpop.f32.mrf.mxu0
        %1249 = vdwg.mxu0
        %vm1250 = vcmask 64512
        %v1251 = vsel %vm1250, %v1228, -inf
        %1252 = vmax.xlane.f32.xlu0 %v1251
        %v1253 = vpop.xlane.xlu0 %1252
        %v1254 = vsel %vm1250, %v1247, -inf
        %1255 = vmax.xlane.f32.xlu0 %v1254
        %v1256 = vpop.xlane.xlu0 %1255
        %v1257 = vsub.f32 %v1228, %v1253
        %v1258 = vsub.f32 %v1247, %v1256
        %v1259 = vmul.f32 %v1257, 1.442695
        %v1260 = vpow.pop %v1259
        %v1261 = vmul.f32 %v1258, 1.442695
        %v1262 = vpow.pop %v1261
        %v1263 = vsel %vm1250, %v1260, 0.0
        %1264 = vadd.xlane.f32.xlu0 %v1263
        %v1265 = vpop.xlane.xlu0 %1264
        %v1266 = vsel %vm1250, %v1262, 0.0
        %1267 = vadd.xlane.f32.xlu0 %v1266
        %v1268 = vpop.xlane.xlu0 %1267
        %v1269 = vrcp.pop %v1265
        %v1270 = vrcp.pop %v1268
        %v1271 = vmul.f32 %v1260, %v1269
        %v1272 = vmul.f32 %v1262, %v1270
        %v1273 = vpack.c.bf16 %v1271, %v1271
        %v1274 = vpack.c.bf16 %v1272, %v1272
        %v1275 = vpack.c.bf16 %v1199, %v1199
        %v1276 = vpack.c.bf16 %v1201, %v1201
        %v1278 = vsel %vm1250, %v1273, 0
        %vm1280 = vcmask 1043456
        %v1282 = vsel %vm1280, %v1275, 0
        %1284 = vmatpush.bf16.msra.mxu0 0
        %1285 = vmatpush.bf16.msra.mxu0 0
        %1286 = vmatpush.bf16.msra.mxu0 0
        %1287 = vmatpush.bf16.msra.mxu0 0
        %1288 = vmatpush.bf16.msra.mxu0 0
        %1289 = vmatpush.bf16.msra.mxu0 0
        %1290 = vmatpush.bf16.msra.mxu0 0
        %1291 = vmatpush.bf16.msra.mxu0 %v1282
        %1292 = vmatmul.bf16.gmra.mxu0 %v1278
        %v1293 = vpop.f32.mrf.mxu0
        %v1294 = vadd.f32 0.0, %v1293
        %v1295 = vpop.f32.mrf.mxu0
        %1296 = vdwg.mxu0
        %v1298 = vsel %vm1250, %v1274, 0
        %v1301 = vsel %vm1280, %v1276, 0
        %1303 = vmatpush.bf16.msra.mxu0 0
        %1304 = vmatpush.bf16.msra.mxu0 0
        %1305 = vmatpush.bf16.msra.mxu0 0
        %1306 = vmatpush.bf16.msra.mxu0 0
        %1307 = vmatpush.bf16.msra.mxu0 0
        %1308 = vmatpush.bf16.msra.mxu0 0
        %1309 = vmatpush.bf16.msra.mxu0 0
        %1310 = vmatpush.bf16.msra.mxu0 %v1301
        %1311 = vmatmul.bf16.gmra.mxu0 %v1298
        %v1312 = vpop.f32.mrf.mxu0
        %v1313 = vadd.f32 0.0, %v1312
        %v1314 = vpop.f32.mrf.mxu0
        %1315 = vdwg.mxu0
        %v1316 = vpack.c.bf16 %v1313, %v1294
        %v1318 = vunpack.c.l.b16 %v1207
        %v1319 = vpack.c.b16 %v1318, %v1318
        %1320 = vrot.lane.b32.xlu0 %v1319, 112
        %v1321 = vpop.permute.xlu0 %1320
        %v1323 = vunpack.c.l.b16 %v1209
        %v1324 = vpack.c.b16 %v1323, %v1323
        %1325 = vrot.lane.b32.xlu0 %v1324, 112
        %v1326 = vpop.permute.xlu0 %1325
        %v1328 = vsel %vm1211, %v1321, 0
        %v1331 = vsel %vm1211, %v1326, 0
        %1333 = vmatpush.bf16.xpose.msra.mxu0 0
        %1334 = vmatpush.bf16.xpose.msra.mxu0 0
        %1335 = vmatpush.bf16.xpose.msra.mxu0 0
        %1336 = vmatpush.bf16.xpose.msra.mxu0 0
        %1337 = vmatpush.bf16.xpose.msra.mxu0 0
        %1338 = vmatpush.bf16.xpose.msra.mxu0 0
        %1339 = vmatpush.bf16.xpose.msra.mxu0 0
        %1340 = vmatpush.bf16.xpose.msra.mxu0 %v1331
        %1341 = vmatmul.bf16.gmra.mxu0 %v1328
        %v1342 = vpop.f32.mrf.mxu0
        %v1343 = vadd.f32 0.0, %v1342
        %v1344 = vpop.f32.mrf.mxu0
        %1345 = vdwg.mxu0
        %v1347 = vunpack.c.l.b16 %v1208
        %v1348 = vpack.c.b16 %v1347, %v1347
        %1349 = vrot.lane.b32.xlu0 %v1348, 112
        %v1350 = vpop.permute.xlu0 %1349
        %v1352 = vunpack.c.l.b16 %v1210
        %v1353 = vpack.c.b16 %v1352, %v1352
        %1354 = vrot.lane.b32.xlu0 %v1353, 112
        %v1355 = vpop.permute.xlu0 %1354
        %v1357 = vsel %vm1211, %v1350, 0
        %v1360 = vsel %vm1211, %v1355, 0
        %1362 = vmatpush.bf16.xpose.msra.mxu0 0
        %1363 = vmatpush.bf16.xpose.msra.mxu0 0
        %1364 = vmatpush.bf16.xpose.msra.mxu0 0
        %1365 = vmatpush.bf16.xpose.msra.mxu0 0
        %1366 = vmatpush.bf16.xpose.msra.mxu0 0
        %1367 = vmatpush.bf16.xpose.msra.mxu0 0
        %1368 = vmatpush.bf16.xpose.msra.mxu0 0
        %1369 = vmatpush.bf16.xpose.msra.mxu0 %v1360
        %1370 = vmatmul.bf16.gmra.mxu0 %v1357
        %v1371 = vpop.f32.mrf.mxu0
        %v1372 = vadd.f32 0.0, %v1371
        %v1373 = vpop.f32.mrf.mxu0
        %1374 = vdwg.mxu0
        %v1375 = vsel %vm1250, %v1343, -inf
        %1376 = vmax.xlane.f32.xlu0 %v1375
        %v1377 = vpop.xlane.xlu0 %1376
        %v1378 = vsel %vm1250, %v1372, -inf
        %1379 = vmax.xlane.f32.xlu0 %v1378
        %v1380 = vpop.xlane.xlu0 %1379
        %v1381 = vsub.f32 %v1343, %v1377
        %v1382 = vsub.f32 %v1372, %v1380
        %v1383 = vmul.f32 %v1381, 1.442695
        %v1384 = vpow.pop %v1383
        %v1385 = vmul.f32 %v1382, 1.442695
        %v1386 = vpow.pop %v1385
        %v1387 = vsel %vm1250, %v1384, 0.0
        %1388 = vadd.xlane.f32.xlu0 %v1387
        %v1389 = vpop.xlane.xlu0 %1388
        %v1390 = vsel %vm1250, %v1386, 0.0
        %1391 = vadd.xlane.f32.xlu0 %v1390
        %v1392 = vpop.xlane.xlu0 %1391
        %v1393 = vrcp.pop %v1389
        %v1394 = vrcp.pop %v1392
        %v1395 = vmul.f32 %v1384, %v1393
        %v1396 = vmul.f32 %v1386, %v1394
        %v1397 = vpack.c.bf16 %v1395, %v1395
        %v1398 = vpack.c.bf16 %v1396, %v1396
        %v1400 = vunpack.c.l.b16 %v1275
        %v1401 = vpack.c.b16 %v1400, %v1400
        %1402 = vrot.lane.b32.xlu0 %v1401, 112
        %v1403 = vpop.permute.xlu0 %1402
        %v1405 = vsel %vm1250, %v1397, 0
        %v1408 = vsel %vm1280, %v1403, 0
        %1410 = vmatpush.bf16.msra.mxu0 0
        %1411 = vmatpush.bf16.msra.mxu0 0
        %1412 = vmatpush.bf16.msra.mxu0 0
        %1413 = vmatpush.bf16.msra.mxu0 0
        %1414 = vmatpush.bf16.msra.mxu0 0
        %1415 = vmatpush.bf16.msra.mxu0 0
        %1416 = vmatpush.bf16.msra.mxu0 0
        %1417 = vmatpush.bf16.msra.mxu0 %v1408
        %1418 = vmatmul.bf16.gmra.mxu0 %v1405
        %v1419 = vpop.f32.mrf.mxu0
        %v1420 = vadd.f32 0.0, %v1419
        %v1421 = vpop.f32.mrf.mxu0
        %1422 = vdwg.mxu0
        %v1424 = vunpack.c.l.b16 %v1276
        %v1425 = vpack.c.b16 %v1424, %v1424
        %1426 = vrot.lane.b32.xlu0 %v1425, 112
        %v1427 = vpop.permute.xlu0 %1426
        %v1429 = vsel %vm1250, %v1398, 0
        %v1432 = vsel %vm1280, %v1427, 0
        %1434 = vmatpush.bf16.msra.mxu0 0
        %1435 = vmatpush.bf16.msra.mxu0 0
        %1436 = vmatpush.bf16.msra.mxu0 0
        %1437 = vmatpush.bf16.msra.mxu0 0
        %1438 = vmatpush.bf16.msra.mxu0 0
        %1439 = vmatpush.bf16.msra.mxu0 0
        %1440 = vmatpush.bf16.msra.mxu0 0
        %1441 = vmatpush.bf16.msra.mxu0 %v1432
        %1442 = vmatmul.bf16.gmra.mxu0 %v1429
        %v1443 = vpop.f32.mrf.mxu0
        %v1444 = vadd.f32 0.0, %v1443
        %v1445 = vpop.f32.mrf.mxu0
        %1446 = vdwg.mxu0
        %v1447 = vpack.c.bf16 %v1444, %v1420
        %v1450 = vunpack.c.l.b16 %v1205
        %v1451 = vunpack.c.l.b16 %v1206
        %v1452 = vpack.c.b16 %v1451, %v1450
        %v1455 = vsel %vm1211, %v1447, 0
        %1457 = vmatpush.bf16.msra.mxu0 0
        %1458 = vmatpush.bf16.msra.mxu0 0
        %1459 = vmatpush.bf16.msra.mxu0 0
        %1460 = vmatpush.bf16.msra.mxu0 0
        %1461 = vmatpush.bf16.msra.mxu0 0
        %1462 = vmatpush.bf16.msra.mxu0 0
        %1463 = vmatpush.bf16.msra.mxu0 0
        %1464 = vmatpush.bf16.msra.mxu0 %v1452
        %1465 = vmatmul.bf16.gmra.mxu0 %v1455
        %v1466 = vpop.f32.mrf.mxu0
        %v1467 = vadd.f32 0.0, %v1466
        %v1468 = vpop.f32.mrf.mxu0
        %v1469 = vadd.f32 0.0, %v1468
        %1470 = vdwg.mxu0
        %v1473 = vunpack.c.l.b16 %v1203
        %v1474 = vunpack.c.l.b16 %v1204
        %v1475 = vpack.c.b16 %v1474, %v1473
        %v1478 = vsel %vm1211, %v1316, 0
        %1480 = vmatpush.bf16.msra.mxu0 0
        %1481 = vmatpush.bf16.msra.mxu0 0
        %1482 = vmatpush.bf16.msra.mxu0 0
        %1483 = vmatpush.bf16.msra.mxu0 0
        %1484 = vmatpush.bf16.msra.mxu0 0
        %1485 = vmatpush.bf16.msra.mxu0 0
        %1486 = vmatpush.bf16.msra.mxu0 0
        %1487 = vmatpush.bf16.msra.mxu0 %v1475
        %1488 = vmatmul.bf16.gmra.mxu0 %v1478
        %v1489 = vpop.f32.mrf.mxu0
        %v1490 = vadd.f32 %v1467, %v1489
        %v1491 = vpop.f32.mrf.mxu0
        %v1492 = vadd.f32 %v1469, %v1491
        %1493 = vdwg.mxu0
        %v1494 = vld [vmem:[%s1044] sm:$0x1]
        %v1496 = vperm.slane %v1494, 0
        %v1498 = vadd.f32 %v1490, %v1496
        %v1499 = vadd.f32 %v1492, %v1496
        %v1500 = vadd.f32 %v1082, %v1498
        %v1501 = vadd.f32 %v1083, %v1499
        %v1502 = vsel %vm1109, %v1500, 0.0
        %1503 = vadd.xlane.f32.xlu0 %v1502
        %v1504 = vpop.xlane.xlu0 %1503
        %v1505 = vsel %vm1109, %v1501, 0.0
        %1506 = vadd.xlane.f32.xlu0 %v1505
        %v1507 = vpop.xlane.xlu0 %1506
        %v1508 = vrcp.pop 32.0
        %v1509 = vmul.f32 32.0, %v1508
        %v1510 = vsub.f32 1.0, %v1509
        %v1511 = vmul.f32 %v1508, %v1510
        %v1512 = vadd.f32 %v1508, %v1511
        %vm1513 = vweird.f32 %v1508
        %v1514 = vsel %vm1513, %v1508, %v1512
        %v1515 = vmul.f32 %v1504, %v1514
        %v1516 = vmul.f32 %v1507, %v1514
        %v1517 = vsub.f32 %v1500, %v1515
        %v1518 = vsub.f32 %v1501, %v1516
        %v1519 = vmul.f32 %v1517, %v1517
        %v1520 = vmul.f32 %v1518, %v1518
        %v1521 = vsel %vm1109, %v1519, 0.0
        %1522 = vadd.xlane.f32.xlu0 %v1521
        %v1523 = vpop.xlane.xlu0 %1522
        %v1524 = vsel %vm1109, %v1520, 0.0
        %1525 = vadd.xlane.f32.xlu0 %v1524
        %v1526 = vpop.xlane.xlu0 %1525
        %v1527 = vmul.f32 %v1523, %v1514
        %v1528 = vmul.f32 %v1526, %v1514
        %v1529 = vadd.f32 %v1527, 1e-05
        %v1530 = vadd.f32 %v1528, 1e-05
        %v1531 = vrsqrt.pop %v1529
        %v1532 = vmul.f32 %v1531, %v1529
        %v1533 = vmul.f32 %v1532, %v1531
        %v1534 = vmul.f32 0.5, %v1533
        %v1535 = vsub.f32 1.5, %v1534
        %v1536 = vmul.f32 %v1531, %v1535
        %vm1537 = vweird.f32 %v1529
        %vm1538 = vweird.f32 %v1531
        %vm1539 = vmor %vm1537, %vm1538
        %v1540 = vsel %vm1539, %v1531, %v1536
        %v1541 = vrsqrt.pop %v1530
        %v1542 = vmul.f32 %v1541, %v1530
        %v1543 = vmul.f32 %v1542, %v1541
        %v1544 = vmul.f32 0.5, %v1543
        %v1545 = vsub.f32 1.5, %v1544
        %v1546 = vmul.f32 %v1541, %v1545
        %vm1547 = vweird.f32 %v1530
        %vm1548 = vweird.f32 %v1541
        %vm1549 = vmor %vm1547, %vm1548
        %v1550 = vsel %vm1549, %v1541, %v1546
        %v1551 = vmul.f32 %v1517, %v1540
        %v1552 = vmul.f32 %v1518, %v1550
        %v1553 = vld [vmem:[%s868] sm:$0x1]
        %v1555 = vperm.slane %v1553, 0
        %v1557 = vmul.f32 %v1551, %v1555
        %v1558 = vmul.f32 %v1552, %v1555
        %v1559 = vld [vmem:[%s1047] sm:$0x1]
        %v1561 = vperm.slane %v1559, 0
        %v1563 = vadd.f32 %v1557, %v1561
        %v1564 = vadd.f32 %v1558, %v1561
        %v1565 = vpack.c.bf16 %v1564, %v1563
        %v1566 = vld [vmem:[%s878] sm:$0xf]
        %v1567 = vld [vmem:[%s878 + $0x4] sm:$0xf]
        %v1568 = vld [vmem:[%s878 + $0x8] sm:$0xf]
        %v1569 = vld [vmem:[%s878 + $0xc] sm:$0xf]
        %v1570 = vld [vmem:[%s1050] sm:$0x1]
        %v1572 = vperm.slane %v1570, 0
        %v1578 = vunpack.c.l.b16 %v1566
        %v1579 = vunpack.c.l.b16 %v1567
        %v1580 = vunpack.c.l.b16 %v1568
        %v1581 = vunpack.c.l.b16 %v1569
        %v1582 = vpack.c.b16 %v1579, %v1578
        %v1583 = vpack.c.b16 %v1581, %v1580
        %v1587 = vsel %vm1109, %v1565, 0
        %1589 = vmatpush.bf16.msra.mxu0 0
        %1590 = vmatpush.bf16.msra.mxu0 0
        %1591 = vmatpush.bf16.msra.mxu0 0
        %1592 = vmatpush.bf16.msra.mxu0 0
        %1593 = vmatpush.bf16.msra.mxu0 0
        %1594 = vmatpush.bf16.msra.mxu0 0
        %1595 = vmatpush.bf16.msra.mxu0 %v1583
        %1596 = vmatpush.bf16.msra.mxu0 %v1582
        %1597 = vmatmul.bf16.gmra.mxu0 %v1587
        %v1598 = vpop.f32.mrf.mxu0
        %v1599 = vadd.f32 %v1572, %v1598
        %v1600 = vpop.f32.mrf.mxu0
        %v1601 = vadd.f32 %v1572, %v1600
        %1602 = vdwg.mxu0
        %v1603 = vmax.f32 %v1599, 0.0
        %v1604 = vmax.f32 %v1601, 0.0
        %v1605 = vpack.c.bf16 %v1604, %v1603
        %v1606 = vld [vmem:[%s1055] sm:$0xf]
        %v1607 = vld [vmem:[%s1055 + $0x4] sm:$0xf]
        %v1608 = vld [vmem:[%s1055 + $0x8] sm:$0xf]
        %v1609 = vld [vmem:[%s1055 + $0xc] sm:$0xf]
        %v1610 = vld [vmem:[%s1055 + $0x10] sm:$0xf]
        %v1611 = vld [vmem:[%s1055 + $0x14] sm:$0xf]
        %v1612 = vld [vmem:[%s1055 + $0x18] sm:$0xf]
        %v1613 = vld [vmem:[%s1055 + $0x1c] sm:$0xf]
        %v1614 = vld [vmem:[%s1058] sm:$0x1]
        %v1616 = vperm.slane %v1614, 0
        %v1626 = vunpack.c.l.b16 %v1606
        %v1627 = vunpack.c.l.b16 %v1607
        %v1628 = vunpack.c.l.b16 %v1608
        %v1629 = vunpack.c.l.b16 %v1609
        %v1630 = vunpack.c.l.b16 %v1610
        %v1631 = vunpack.c.l.b16 %v1611
        %v1632 = vunpack.c.l.b16 %v1612
        %v1633 = vunpack.c.l.b16 %v1613
        %v1634 = vpack.c.b16 %v1627, %v1626
        %v1635 = vpack.c.b16 %v1629, %v1628
        %v1636 = vpack.c.b16 %v1631, %v1630
        %v1637 = vpack.c.b16 %v1633, %v1632
        %vm1642 = vcmask 523264
        %v1644 = vsel %vm1642, %v1605, 0
        %1646 = vmatpush.bf16.msra.mxu0 0
        %1647 = vmatpush.bf16.msra.mxu0 0
        %1648 = vmatpush.bf16.msra.mxu0 0
        %1649 = vmatpush.bf16.msra.mxu0 0
        %1650 = vmatpush.bf16.msra.mxu0 %v1637
        %1651 = vmatpush.bf16.msra.mxu0 %v1636
        %1652 = vmatpush.bf16.msra.mxu0 %v1635
        %1653 = vmatpush.bf16.msra.mxu0 %v1634
        %1654 = vmatmul.bf16.gmra.mxu0 %v1644
        %v1655 = vpop.f32.mrf.mxu0
        %v1656 = vadd.f32 %v1616, %v1655
        %v1657 = vpop.f32.mrf.mxu0
        %v1658 = vadd.f32 %v1616, %v1657
        %1659 = vdwg.mxu0
        %v1660 = vadd.f32 %v1563, %v1656
        %v1661 = vadd.f32 %v1564, %v1658
        %v1662 = vsel %vm1109, %v1660, 0.0
        %1663 = vadd.xlane.f32.xlu0 %v1662
        %v1664 = vpop.xlane.xlu0 %1663
        %v1665 = vsel %vm1109, %v1661, 0.0
        %1666 = vadd.xlane.f32.xlu0 %v1665
        %v1667 = vpop.xlane.xlu0 %1666
        %v1668 = vmul.f32 %v1664, %v1514
        %v1669 = vmul.f32 %v1667, %v1514
        %v1670 = vsub.f32 %v1660, %v1668
        %v1671 = vsub.f32 %v1661, %v1669
        %v1672 = vmul.f32 %v1670, %v1670
        %v1673 = vmul.f32 %v1671, %v1671
        %v1674 = vsel %vm1109, %v1672, 0.0
        %1675 = vadd.xlane.f32.xlu0 %v1674
        %v1676 = vpop.xlane.xlu0 %1675
        %v1677 = vsel %vm1109, %v1673, 0.0
        %1678 = vadd.xlane.f32.xlu0 %v1677
        %v1679 = vpop.xlane.xlu0 %1678
        %v1680 = vmul.f32 %v1676, %v1514
        %v1681 = vmul.f32 %v1679, %v1514
        %v1682 = vadd.f32 %v1680, 1e-05
        %v1683 = vadd.f32 %v1681, 1e-05
        %v1684 = vrsqrt.pop %v1682
        %v1685 = vmul.f32 %v1684, %v1682
        %v1686 = vmul.f32 %v1685, %v1684
        %v1687 = vmul.f32 0.5, %v1686
        %v1688 = vsub.f32 1.5, %v1687
        %v1689 = vmul.f32 %v1684, %v1688
        %vm1690 = vweird.f32 %v1682
        %vm1691 = vweird.f32 %v1684
        %vm1692 = vmor %vm1690, %vm1691
        %v1693 = vsel %vm1692, %v1684, %v1689
        %v1694 = vrsqrt.pop %v1683
        %v1695 = vmul.f32 %v1694, %v1683
        %v1696 = vmul.f32 %v1695, %v1694
        %v1697 = vmul.f32 0.5, %v1696
        %v1698 = vsub.f32 1.5, %v1697
        %v1699 = vmul.f32 %v1694, %v1698
        %vm1700 = vweird.f32 %v1683
        %vm1701 = vweird.f32 %v1694
        %vm1702 = vmor %vm1700, %vm1701
        %v1703 = vsel %vm1702, %v1694, %v1699
        %v1704 = vmul.f32 %v1670, %v1693
        %v1705 = vmul.f32 %v1671, %v1703
        %v1706 = vld [vmem:[%s887] sm:$0x1]
        %v1708 = vperm.slane %v1706, 0
        %v1710 = vmul.f32 %v1704, %v1708
        %v1711 = vmul.f32 %v1705, %v1708
        %v1712 = vld [vmem:[%s1061] sm:$0x1]
        %v1714 = vperm.slane %v1712, 0
        %v1716 = vadd.f32 %v1710, %v1714
        %v1717 = vadd.f32 %v1711, %v1714
        %1718 = vst.msk [vmem:[#allocation2] sm:$0xff] %vm1109, %v1716
        %1719 = vst.msk [vmem:[#allocation2 + $0x8] sm:$0xff] %vm1109, %v1717
        // Predicated region
        $region129: #{tpu_custom_call.1} parent=95 // pred_check
          %p1720 = pneg %p1065
        $region130: #{tpu_custom_call.1} parent=95 // pred_check_branch
          %1722 = sbr.rel (%p1720) target = $region132
        $region131: #{tpu_custom_call.1} parent=95 // pred_region
          %v1723 = vsel %vm1109, %v1716, -inf
          %v1724 = vrot.slane %v1723, 4
          %v1725 = vmax.f32 %v1723, %v1724
          %v1726 = vrot.slane %v1725, 2
          %v1727 = vmax.f32 %v1725, %v1726
          %v1728 = vrot.slane %v1727, 1
          %v1729 = vmax.f32 %v1727, %v1728
          %v1730 = vsel %vm1109, %v1717, -inf
          %v1731 = vrot.slane %v1730, 4
          %v1732 = vmax.f32 %v1730, %v1731
          %v1733 = vrot.slane %v1732, 2
          %v1734 = vmax.f32 %v1732, %v1733
          %v1735 = vrot.slane %v1734, 1
          %v1736 = vmax.f32 %v1734, %v1735
          %vm1737 = vcmask 253952
          %1738 = vst.msk [vmem:[%s1014] sm:$0x1] %vm1737, %v1729
          %1739 = vst.msk [vmem:[%s1014 + $0x1] sm:$0x1] %vm1737, %v1736
        $region132: #{tpu_custom_call.1} parent=95 // pred_fallthru
          _
        %s1740 = sand.u32 %s559, 1
        %s1741 = scalar_lea.sflag [#allocation5], %s1740
        %s1742 = sand.u32 %s559, 1
        %s1743 = smul.addr %s1742, 2
        %s1744 = scalar_lea.vmem [#allocation15], %s1743
        // Predicated region
        $region133: #{tpu_custom_call.1} parent=95 // pred_check
          %p1745 = pneg %p569
        $region134: #{tpu_custom_call.1} parent=95 // pred_check_branch
          %1747 = sbr.rel (%p1745) target = $region136
        $region135: #{tpu_custom_call.1} parent=95 // pred_region
          %s1748 = smul.u32 2, %s49
          %1750 = vsyncadd %s1741, 0
          %s1751 = scalar_lea.hbm %s19, %s1748
          %s1752 = sshll.u32 %s1744, 4
          %s1753 = int_to_ptr.vmem [resolvable:$true] %s1752
          %s1754 = sshll.u32 %s1751, 4
          %s1755 = int_to_ptr.hbm [resolvable:$true] %s1754
          %1760 = dma.vmem_to_hbm [thread:$0]  %s1753, 32, %s1755, %s1741, 16, 16, 1
        $region136: #{tpu_custom_call.1} parent=95 // pred_fallthru
          _
      $region96: #{tpu_custom_call.1} parent=5 // pred_fallthru
        _
      %p1761 = scmp.le.s32.totalorder 2, %s40
      // Predicated region
      $region137: #{tpu_custom_call.1} parent=5 // pred_check
        %p1762 = pneg %p1761
      $region138: #{tpu_custom_call.1} parent=5 // pred_check_branch
        %1764 = sbr.rel (%p1762) target = $region140
      $region139: #{tpu_custom_call.1} parent=5 // pred_region
        %s1765 = ssub.s32 %s40, 2
        // Predicated region
        $region141: #{tpu_custom_call.1} parent=139 // pred_check
          %p1766 = pneg %p575
        $region142: #{tpu_custom_call.1} parent=139 // pred_check_branch
          %1768 = sbr.rel (%p1766) target = $region144
        $region143: #{tpu_custom_call.1} parent=139 // pred_region
          %s1769 = sand.u32 %s560, 1
          %s1770 = scalar_lea.sflag [#allocation5], %s1769
          %s1771 = sand.u32 %s560, 1
          %s1772 = smul.addr %s1771, 2
          %s1773 = scalar_lea.vmem [#allocation15], %s1772
          %1775 = dma.done %s1770, 32
        $region144: #{tpu_custom_call.1} parent=139 // pred_fallthru
          _
      $region140: #{tpu_custom_call.1} parent=5 // pred_fallthru
        _
    $region6: #{tpu_custom_call.1} parent=1 // loop_footer
      %s44 = sadd.s32 1, %s40
    $region7: #{tpu_custom_call.1} parent=1 // loop_footer_branch
      %39 = sbr.rel target = $region3
    $region8: #{tpu_custom_call.1} parent=1 // loop_exit
      _
    %1776 = vsyncpa [#allocation4], 1
    %s1777 = scalar_lea.sflag [#allocation4], 1
    %1778 = vsyncpa %s1777, 1
    %1779 = vsyncpa [#allocation7], 1
    %s1780 = scalar_lea.sflag [#allocation7], 1
    %1781 = vsyncpa %s1780, 1
    %1782 = vsyncpa [#allocation10], 1
    %s1783 = scalar_lea.sflag [#allocation10], 1
    %1784 = vsyncpa %s1783, 1
    %1785 = vsyncpa [#allocation13], 1
    %s1786 = scalar_lea.sflag [#allocation13], 1
    %1787 = vsyncpa %s1786, 1
    %1788 = vsyncpa [#allocation5], 1
    %s1789 = scalar_lea.sflag [#allocation5], 1
    %1790 = vsyncpa %s1789, 1

</llo_original>
